<compile_context>
chip_gen: v6e
topology: v6e:2x2x1
jax: 0.10.0
libtpu: 0.0.40
codegen_flags: <defaults>
</compile_context>

<pallas_src>
import functools

import jax
import jax.numpy as jnp
from jax.experimental import pallas as pl
from jax.experimental.pallas import tpu as pltpu

_LANE = 128   # lane width (last-dim tiling unit)
_SUB = 16     # sublane rounding for bf16 second-to-last dims


def _round_up(x, m):
    return ((x + m - 1) // m) * m


def _feat_pad(d):
    # Pad feature dims to a lane multiple with at least one SPARE column; the
    # spare column carries 1.0 so in-degree falls out of A @ H for free.
    return _round_up(d + 1, _LANE)


def _pad2(x, rows, cols):
    r, c = x.shape
    return jnp.pad(x, ((0, rows - r), (0, cols - c)))


def _vmem_budget():
    """Generation-adaptive VMEM budget (v5e/v6e: 128 MiB, v7x: 64 MiB)."""
    try:
        cap = int(pltpu.get_tpu_info().vmem_capacity_bytes)
    except Exception:
        cap = 64 * 1024 * 1024
    return max(32 * 1024 * 1024, min(int(cap * 0.7), 96 * 1024 * 1024))


def _vmem_need(tm, tk, dinp, doutp):
    a = 2 * tm * tk * 2              # A tiles, double-buffered bf16
    hsrc = 2 * tk * dinp * 2         # H (src role)
    hdst = 2 * tm * dinp * 2         # H (dst role, k-invariant)
    w = 2 * 2 * dinp * doutp * 2     # W_self + W_neigh (DMA'd once, 2x alloc)
    out = 2 * tm * doutp * 4         # output tile (f32 worst case)
    acc = tm * dinp * 4              # f32 accumulator scratch
    return a + hsrc + hdst + w + out + acc + (2 << 20)   # + compiler scratch


def _choose_tiles(n_dst, n_src, dinp, doutp, tm_req, tk_req, budget):
    # H_src re-stream traffic scales as dinp/tm -> prefer tm >= dinp.
    tm = min(_round_up(max(tm_req, dinp), _SUB), _round_up(n_dst, _SUB))
    tk = min(_round_up(tk_req, _LANE), _round_up(n_src, _LANE))
    # Keep >= 2 dst row-blocks when there is enough work ('parallel' axis ->
    # both v7x TensorCores busy).
    if n_dst > 256 and _round_up(n_dst, tm) == tm:
        tm = _round_up(pl.cdiv(n_dst, 2), _SUB)
    # Shrink until the double-buffered working set fits the VMEM budget;
    # shrink tk first (it does not increase H_src re-streaming, tm does).
    while _vmem_need(tm, tk, dinp, doutp) > budget:
        if tk > 4 * _LANE:
            tk = _round_up(tk // 2, _LANE)
        elif tm > 4 * _SUB:
            tm = _round_up(tm // 2, _SUB)
        else:
            break
    return tm, tk


# ---------------------------------------------------------------------------
# Tiled per-layer kernel (large-graph path)
# ---------------------------------------------------------------------------
def _sage_layer_kernel(d_in, d_out, is_last,
                       a_ref, hsrc_ref, hdst_ref, ws_ref, wn_ref, b_ref,
                       out_ref, acc_ref):
    """One grid step of SAGEConv('mean') + ReLU.

    grid = (dst row-blocks ['parallel'], src col-blocks ['arbitrary', reduction]).
    Column d_in of H_src is all-ones, so acc[:, d_in] is the in-degree
    (binary adjacency / eval mode) -- no VPU/XLU degree pass over A.
    """
    k = pl.program_id(1)

    @pl.when(k == 0)
    def _init():
        acc_ref[...] = jnp.zeros_like(acc_ref)

    acc_ref[...] += jnp.dot(a_ref[...], hsrc_ref[...],
                            preferred_element_type=jnp.float32)

    @pl.when(k == pl.num_programs(1) - 1)
    def _finalize():
        acc = acc_ref[...]
        deg = jnp.maximum(acc[:, d_in:d_in + 1], 1.0)     # degree from ones column
        agg = (acc / deg).astype(hsrc_ref.dtype)          # mean aggregation
        # Two MXU dots (no concat / stacked-weight copy).
        z = (jnp.dot(hdst_ref[...], ws_ref[...], preferred_element_type=jnp.float32)
             + jnp.dot(agg, wn_ref[...], preferred_element_type=jnp.float32)
             + b_ref[...])
        z = jnp.maximum(z, 0.0)                           # activation = ReLU
        if is_last:
            out_ref[...] = z.astype(out_ref.dtype)
        else:
            # Re-plant the ones (degree) column for the next layer's H_src.
            col = jax.lax.broadcasted_iota(jnp.int32, z.shape, 1)
            out_ref[...] = jnp.where(col == d_out, 1.0, z).astype(out_ref.dtype)


def _sage_layer_tiled(a_p, h_p, ws_p, wn_p, b_p, *, d_in, d_out, tm, tk,
                      is_last, vmem_limit):
    mp, kp = a_p.shape
    dinp = h_p.shape[1]
    doutp = ws_p.shape[1]
    out_dtype = jnp.float32 if is_last else jnp.bfloat16
    grid = (mp // tm, kp // tk)
    return pl.pallas_call(
        functools.partial(_sage_layer_kernel, d_in, d_out, is_last),
        out_shape=jax.ShapeDtypeStruct((mp, doutp), out_dtype),
        grid_spec=pltpu.PrefetchScalarGridSpec(
            num_scalar_prefetch=0,
            grid=grid,
            in_specs=[
                pl.BlockSpec((tm, tk), lambda i, k: (i, k)),       # A (streamed once)
                pl.BlockSpec((tk, dinp), lambda i, k: (k, 0)),     # H, src role
                pl.BlockSpec((tm, dinp), lambda i, k: (i, 0)),     # H, dst role (k-invariant)
                pl.BlockSpec((dinp, doutp), lambda i, k: (0, 0)),  # W_self (grid-invariant)
                pl.BlockSpec((dinp, doutp), lambda i, k: (0, 0)),  # W_neigh (grid-invariant)
                pl.BlockSpec((1, doutp), lambda i, k: (0, 0)),     # bias
            ],
            out_specs=pl.BlockSpec((tm, doutp), lambda i, k: (i, 0)),
            scratch_shapes=[pltpu.VMEM((tm, dinp), jnp.float32)],  # f32 accumulator
        ),
        compiler_params=pltpu.CompilerParams(
            dimension_semantics=("parallel", "arbitrary"),
            vmem_limit_bytes=vmem_limit),
    )(a_p, h_p, h_p, ws_p, wn_p, b_p)


# ---------------------------------------------------------------------------
# Fully fused layer stack (small-minibatch path): one pallas_call, h stays in VMEM.
# ---------------------------------------------------------------------------
def _make_fused_kernel(dims):
    n_layers = len(dims)

    def kernel(*refs):
        out_ref = refs[1 + 4 * n_layers]
        h = refs[0][...]                                   # (M, dinp0) bf16, ones col at d_in0
        for l, (d_in, d_out) in enumerate(dims):
            a_ref, ws_ref, wn_ref, b_ref = refs[1 + 4 * l: 5 + 4 * l]
            acc = jnp.dot(a_ref[...], h, preferred_element_type=jnp.float32)
            deg = jnp.maximum(acc[:, d_in:d_in + 1], 1.0)
            agg = (acc / deg).astype(jnp.bfloat16)
            z = (jnp.dot(h, ws_ref[...], preferred_element_type=jnp.float32)
                 + jnp.dot(agg, wn_ref[...], preferred_element_type=jnp.float32)
                 + b_ref[...])
            z = jnp.maximum(z, 0.0)
            if l == n_layers - 1:
                out_ref[...] = z
            else:
                col = jax.lax.broadcasted_iota(jnp.int32, z.shape, 1)
                h = jnp.where(col == d_out, 1.0, z).astype(jnp.bfloat16)

    return kernel


# ---------------------------------------------------------------------------
# Packing (done ONCE, outside the jitted hot path)
# ---------------------------------------------------------------------------
def pack_params(params):
    packed = []
    for w_self, w_neigh, bias in params:
        d_in, d_out = w_self.shape
        dinp, doutp = _feat_pad(d_in), _feat_pad(d_out)
        ws = _pad2(jnp.asarray(w_self, jnp.float32), dinp, doutp).astype(jnp.bfloat16)
        wn = _pad2(jnp.asarray(w_neigh, jnp.float32), dinp, doutp).astype(jnp.bfloat16)
        b = _pad2(jnp.asarray(bias, jnp.float32).reshape(1, -1), 1, doutp)
        packed.append((ws, wn, b))
    return packed


def pack_model(params, block_adjs, *, fused=False, tm=512, tk=1024,
               adj_dtype=jnp.bfloat16):
    """Pad/cast adjacencies and weights once.

    On v7x pass adj_dtype=jnp.float8_e4m3fn to halve the A HBM stream
    (0/1 is exact in fp8); keep bf16 on v5e/v6e (no bf16 x fp8 MXU path there).
    """
    assert len(params) == len(block_adjs)
    for l, a in enumerate(block_adjs):
        n_dst, n_src = a.shape
        assert n_dst <= n_src, "DGL block convention: first n_dst src nodes are dst nodes"
        if l > 0:
            assert n_src == block_adjs[l - 1].shape[0], "block chaining mismatch"
        assert params[l][0].shape == params[l][1].shape

    pparams = pack_params(params)
    dims = [(p[0].shape[0], p[0].shape[1]) for p in params]   # (d_in, d_out)
    budget = _vmem_budget()

    if fused:
        m_all = _round_up(block_adjs[0].shape[1], _LANE)       # unified node padding
        layers = []
        for a, (ws, wn, b), (d_in, d_out) in zip(block_adjs, pparams, dims):
            a_p = _pad2(jnp.asarray(a, jnp.float32), m_all, m_all).astype(adj_dtype)
            layers.append(dict(a=a_p, ws=ws, wn=wn, b=b, d_in=d_in, d_out=d_out,
                               n_dst=a.shape[0], n_src=a.shape[1]))
        return dict(fused=True, layers=layers, m_all=m_all,
                    d_in0=dims[0][0], vmem_limit=budget)

    layers = []
    for a, (ws, wn, b), (d_in, d_out) in zip(block_adjs, pparams, dims):
        n_dst, n_src = a.shape
        dinp, doutp = _feat_pad(d_in), _feat_pad(d_out)
        ltm, ltk = _choose_tiles(n_dst, n_src, dinp, doutp, tm, tk, budget)
        mp, kp = _round_up(n_dst, ltm), _round_up(n_src, ltk)
        a_p = _pad2(jnp.asarray(a, jnp.float32), mp, kp).astype(adj_dtype)
        layers.append(dict(a=a_p, ws=ws, wn=wn, b=b, d_in=d_in, d_out=d_out,
                           n_dst=n_dst, n_src=n_src, tm=ltm, tk=ltk))
    return dict(fused=False, layers=layers, d_in0=dims[0][0], vmem_limit=budget)


def _pack_features(x, d_in, rows):
    dinp = _feat_pad(d_in)
    xp = jnp.pad(x.astype(jnp.float32), ((0, rows - x.shape[0]), (0, dinp - d_in)))
    xp = xp.at[:, d_in].set(1.0)          # ones (degree) column in the spare lane
    return xp.astype(jnp.bfloat16)


# ---------------------------------------------------------------------------
# Forward (jittable; matches SAGEEMB.forward semantics in eval mode)
# ---------------------------------------------------------------------------
def _apply_tiled(packed, x):
    layers = packed["layers"]
    mp0, kp0 = layers[0]["a"].shape
    h = _pack_features(x, packed["d_in0"], max(mp0, kp0))
    n_layers = len(layers)
    for l, L in enumerate(layers):
        mp, kp = L["a"].shape
        rows = max(mp, kp)
        if h.shape[0] < rows:                       # cheap zero row-pad only
            h = jnp.pad(h, ((0, rows - h.shape[0]), (0, 0)))
        h = _sage_layer_tiled(L["a"], h, L["ws"], L["wn"], L["b"],
                              d_in=L["d_in"], d_out=L["d_out"],
                              tm=L["tm"], tk=L["tk"],
                              is_last=(l == n_layers - 1),
                              vmem_limit=packed["vmem_limit"])
    last = layers[-1]
    return h[:last["n_dst"], :last["d_out"]]


def _apply_fused(packed, x):
    layers = packed["layers"]
    dims = [(L["d_in"], L["d_out"]) for L in layers]
    m_all = packed["m_all"]
    args = [_pack_features(x, packed["d_in0"], m_all)]
    for L in layers:
        args += [L["a"], L["ws"], L["wn"], L["b"]]
    doutp_last = layers[-1]["ws"].shape[1]
    out = pl.pallas_call(
        _make_fused_kernel(dims),
        out_shape=jax.ShapeDtypeStruct((m_all, doutp_last), jnp.float32),
        compiler_params=pltpu.CompilerParams(
            vmem_limit_bytes=packed["vmem_limit"]),
    )(*args)
    return out[:layers[-1]["n_dst"], :layers[-1]["d_out"]]


def sageemb_apply(packed, x, train=False, prob_attr=0.5, key=None):
    x = jnp.asarray(x, jnp.float32)
    if train:
        # attrMask (matches reference: x * (rand(n_feat) < prob), no rescale)
        mask = (jax.random.uniform(key, (x.shape[1],)) < prob_attr).astype(x.dtype)
        x = x * mask
        # TODO(synk): training-mode inter-layer dropout & weighted edge_weight
        #             aggregation are not implemented in-kernel (identity here).
    if packed["fused"]:
        return _apply_fused(packed, x)
    return _apply_tiled(packed, x)


# ---------------------------------------------------------------------------
# Pure-JAX reference (correctness check) + init / data helpers
# ---------------------------------------------------------------------------
def sageemb_reference(params, block_adjs, x):
    h = x.astype(jnp.float32)
    for adj, (w_self, w_neigh, b) in zip(block_adjs, params):
        n_dst = adj.shape[0]
        deg = jnp.maximum(
            jnp.sum((adj > 0).astype(jnp.float32), axis=1, keepdims=True), 1.0)
        agg = (adj @ h) / deg
        h = jnp.maximum(h[:n_dst] @ w_self + agg @ w_neigh + b, 0.0)
    return h


def init_params(key, dims):
    params = []
    for (d_in, d_out) in dims:
        key, k1, k2 = jax.random.split(key, 3)
        lim = (6.0 / (d_in + d_out)) ** 0.5
        w_self = jax.random.uniform(k1, (d_in, d_out), jnp.float32, -lim, lim)
        w_neigh = jax.random.uniform(k2, (d_in, d_out), jnp.float32, -lim, lim)
        bias = jnp.zeros((1, d_out), jnp.float32)
        params.append((w_self, w_neigh, bias))
    return params


def make_block_adj(key, n_dst, n_src, p=0.3):
    a = (jax.random.uniform(key, (n_dst, n_src)) < p).astype(jnp.float32)
    eye = jnp.zeros((n_dst, n_src)).at[jnp.arange(n_dst), jnp.arange(n_dst)].set(1.0)
    return jnp.maximum(a, eye)


if __name__ == "__main__":
    key = jax.random.PRNGKey(0)
    (k_x, k_a0, k_a1, k_w, k_x2, k_b0, k_b1, k_w2) = jax.random.split(key, 8)

    # ---- small mini-batch: fully fused single-kernel path -------------------
    in_feats, n_hidden, n_out = 8, 32, 16
    n_src0, n_dst0, n_dst1 = 16, 12, 8

    x = jax.random.normal(k_x, (n_src0, in_feats), jnp.float32)
    adjs = [make_block_adj(k_a0, n_dst0, n_src0, p=0.3),
            make_block_adj(k_a1, n_dst1, n_dst0, p=0.3)]
    params = init_params(k_w, [(in_feats, n_hidden), (n_hidden, n_out)])

    packed_small = pack_model(params, adjs, fused=True)          # pack once
    fwd_small = jax.jit(lambda v: sageemb_apply(packed_small, v))
    out_small = jax.block_until_ready(fwd_small(x))
    ref_small = sageemb_reference(params, adjs, x)
    assert out_small.shape == (n_dst1, n_out)
    assert jnp.allclose(out_small, ref_small, rtol=5e-2, atol=5e-2), \
        float(jnp.max(jnp.abs(out_small - ref_small)))

    # ---- larger graph: tiled (dst-blocks x src-blocks) accumulator path -----
    in_feats2, n_hidden2, n_out2 = 64, 64, 32
    n_src0b, n_dst0b, n_dst1b = 640, 384, 256

    x2 = jax.random.normal(k_x2, (n_src0b, in_feats2), jnp.float32)
    adjs2 = [make_block_adj(k_b0, n_dst0b, n_src0b, p=0.05),
             make_block_adj(k_b1, n_dst1b, n_dst0b, p=0.05)]
    params2 = init_params(k_w2, [(in_feats2, n_hidden2), (n_hidden2, n_out2)])

    # tk=256 forces a multi-step reduction grid to exercise the accumulator.
    packed_big = pack_model(params2, adjs2, fused=False, tm=512, tk=256)
    fwd_big = jax.jit(lambda v: sageemb_apply(packed_big, v))
    out_big = jax.block_until_ready(fwd_big(x2))
    ref_big = sageemb_reference(params2, adjs2, x2)
    assert out_big.shape == (n_dst1b, n_out2)
    assert jnp.allclose(out_big, ref_big, rtol=5e-2, atol=5e-2), \
        float(jnp.max(jnp.abs(out_big - ref_big)))

    print("KERNEL_OK")
</pallas_src>

<mosaic_0001>
module attributes {stable_mosaic.version = 11 : i64} {
  func.func @kernel(%arg0: memref<128x128xbf16, #tpu.memory_space<vmem>>, %arg1: memref<128x128xbf16, #tpu.memory_space<vmem>>, %arg2: memref<128x128xbf16, #tpu.memory_space<vmem>>, %arg3: memref<128x128xbf16, #tpu.memory_space<vmem>>, %arg4: memref<1x128xf32, #tpu.memory_space<vmem>>, %arg5: memref<128x128xbf16, #tpu.memory_space<vmem>>, %arg6: memref<128x128xbf16, #tpu.memory_space<vmem>>, %arg7: memref<128x128xbf16, #tpu.memory_space<vmem>>, %arg8: memref<1x128xf32, #tpu.memory_space<vmem>>, %arg9: memref<128x128xf32, #tpu.memory_space<vmem>>) attributes {dimension_semantics = [], scalar_prefetch = 0 : i64, scratch_operands = 0 : i64, tpu.core_type = #tpu.core_type<tc>} {
    %c0 = arith.constant 0 : index
    %c0_0 = arith.constant 0 : index
    %0 = vector.load %arg0[%c0, %c0_0] : memref<128x128xbf16, #tpu.memory_space<vmem>>, vector<128x128xbf16>
    %c0_1 = arith.constant 0 : index
    %c0_2 = arith.constant 0 : index
    %1 = vector.load %arg1[%c0_1, %c0_2] : memref<128x128xbf16, #tpu.memory_space<vmem>>, vector<128x128xbf16>
    %cst = arith.constant dense<0.000000e+00> : vector<128x128xf32>
    %2 = tpu.matmul %1, %0, %cst {dimension_numbers = #tpu.dot_dimension_numbers<[1], [0], [0], [1], [0, 0, 1, 1], [], []>} : vector<128x128xbf16>, vector<128x128xbf16>, vector<128x128xf32> -> vector<128x128xf32>
    %3 = vector.extract_strided_slice %2 {offsets = [0, 8], sizes = [128, 1], strides = [1, 1]} : vector<128x128xf32> to vector<128x1xf32>
    %cst_3 = arith.constant 1.000000e+00 : f32
    %4 = vector.broadcast %cst_3 : f32 to vector<128x1xf32>
    %5 = arith.maximumf %3, %4 : vector<128x1xf32>
    %6 = vector.broadcast %5 : vector<128x1xf32> to vector<128x128xf32>
    %7 = arith.divf %2, %6 : vector<128x128xf32>
    %8 = arith.truncf %7 : vector<128x128xf32> to vector<128x128xbf16>
    %c0_4 = arith.constant 0 : index
    %c0_5 = arith.constant 0 : index
    %9 = vector.load %arg2[%c0_4, %c0_5] : memref<128x128xbf16, #tpu.memory_space<vmem>>, vector<128x128xbf16>
    %cst_6 = arith.constant dense<0.000000e+00> : vector<128x128xf32>
    %10 = tpu.matmul %0, %9, %cst_6 {dimension_numbers = #tpu.dot_dimension_numbers<[1], [0], [0], [1], [0, 0, 1, 1], [], []>} : vector<128x128xbf16>, vector<128x128xbf16>, vector<128x128xf32> -> vector<128x128xf32>
    %c0_7 = arith.constant 0 : index
    %c0_8 = arith.constant 0 : index
    %11 = vector.load %arg3[%c0_7, %c0_8] : memref<128x128xbf16, #tpu.memory_space<vmem>>, vector<128x128xbf16>
    %cst_9 = arith.constant dense<0.000000e+00> : vector<128x128xf32>
    %12 = tpu.matmul %8, %11, %cst_9 {dimension_numbers = #tpu.dot_dimension_numbers<[1], [0], [0], [1], [0, 0, 1, 1], [], []>} : vector<128x128xbf16>, vector<128x128xbf16>, vector<128x128xf32> -> vector<128x128xf32>
    %13 = arith.addf %10, %12 : vector<128x128xf32>
    %c0_10 = arith.constant 0 : index
    %c0_11 = arith.constant 0 : index
    %14 = vector.load %arg4[%c0_10, %c0_11] : memref<1x128xf32, #tpu.memory_space<vmem>>, vector<1x128xf32>
    %15 = vector.broadcast %14 : vector<1x128xf32> to vector<128x128xf32>
    %16 = arith.addf %13, %15 : vector<128x128xf32>
    %cst_12 = arith.constant 0.000000e+00 : f32
    %17 = vector.broadcast %cst_12 : f32 to vector<128x128xf32>
    %18 = arith.maximumf %16, %17 : vector<128x128xf32>
    %19 = tpu.iota {dimensions = array<i32: 1>} : vector<128x128xi32>
    %c32_i32 = arith.constant 32 : i32
    %20 = vector.broadcast %c32_i32 : i32 to vector<128x128xi32>
    %21 = arith.cmpi eq, %19, %20 : vector<128x128xi32>
    %cst_13 = arith.constant 1.000000e+00 : f32
    %22 = vector.broadcast %cst_13 : f32 to vector<128x128xf32>
    %23 = arith.select %21, %22, %18 : vector<128x128xi1>, vector<128x128xf32>
    %24 = arith.truncf %23 : vector<128x128xf32> to vector<128x128xbf16>
    %c0_14 = arith.constant 0 : index
    %c0_15 = arith.constant 0 : index
    %25 = vector.load %arg5[%c0_14, %c0_15] : memref<128x128xbf16, #tpu.memory_space<vmem>>, vector<128x128xbf16>
    %cst_16 = arith.constant dense<0.000000e+00> : vector<128x128xf32>
    %26 = tpu.matmul %25, %24, %cst_16 {dimension_numbers = #tpu.dot_dimension_numbers<[1], [0], [0], [1], [0, 0, 1, 1], [], []>} : vector<128x128xbf16>, vector<128x128xbf16>, vector<128x128xf32> -> vector<128x128xf32>
    %27 = vector.extract_strided_slice %26 {offsets = [0, 32], sizes = [128, 1], strides = [1, 1]} : vector<128x128xf32> to vector<128x1xf32>
    %cst_17 = arith.constant 1.000000e+00 : f32
    %28 = vector.broadcast %cst_17 : f32 to vector<128x1xf32>
    %29 = arith.maximumf %27, %28 : vector<128x1xf32>
    %30 = vector.broadcast %29 : vector<128x1xf32> to vector<128x128xf32>
    %31 = arith.divf %26, %30 : vector<128x128xf32>
    %32 = arith.truncf %31 : vector<128x128xf32> to vector<128x128xbf16>
    %c0_18 = arith.constant 0 : index
    %c0_19 = arith.constant 0 : index
    %33 = vector.load %arg6[%c0_18, %c0_19] : memref<128x128xbf16, #tpu.memory_space<vmem>>, vector<128x128xbf16>
    %cst_20 = arith.constant dense<0.000000e+00> : vector<128x128xf32>
    %34 = tpu.matmul %24, %33, %cst_20 {dimension_numbers = #tpu.dot_dimension_numbers<[1], [0], [0], [1], [0, 0, 1, 1], [], []>} : vector<128x128xbf16>, vector<128x128xbf16>, vector<128x128xf32> -> vector<128x128xf32>
    %c0_21 = arith.constant 0 : index
    %c0_22 = arith.constant 0 : index
    %35 = vector.load %arg7[%c0_21, %c0_22] : memref<128x128xbf16, #tpu.memory_space<vmem>>, vector<128x128xbf16>
    %cst_23 = arith.constant dense<0.000000e+00> : vector<128x128xf32>
    %36 = tpu.matmul %32, %35, %cst_23 {dimension_numbers = #tpu.dot_dimension_numbers<[1], [0], [0], [1], [0, 0, 1, 1], [], []>} : vector<128x128xbf16>, vector<128x128xbf16>, vector<128x128xf32> -> vector<128x128xf32>
    %37 = arith.addf %34, %36 : vector<128x128xf32>
    %c0_24 = arith.constant 0 : index
    %c0_25 = arith.constant 0 : index
    %38 = vector.load %arg8[%c0_24, %c0_25] : memref<1x128xf32, #tpu.memory_space<vmem>>, vector<1x128xf32>
    %39 = vector.broadcast %38 : vector<1x128xf32> to vector<128x128xf32>
    %40 = arith.addf %37, %39 : vector<128x128xf32>
    %cst_26 = arith.constant 0.000000e+00 : f32
    %41 = vector.broadcast %cst_26 : f32 to vector<128x128xf32>
    %42 = arith.maximumf %40, %41 : vector<128x128xf32>
    %c0_27 = arith.constant 0 : index
    %c0_28 = arith.constant 0 : index
    %43 = vector.load %arg9[%c0_27, %c0_28] : memref<128x128xf32, #tpu.memory_space<vmem>>, vector<128x128xf32>
    tpu.vector_store %arg9[%c0_27, %c0_28], %42 {strides = array<i32>} : memref<128x128xf32, #tpu.memory_space<vmem>>, vector<128x128xf32>,
    return
  }
}

</mosaic_0001>

<llo_original>
// kernel: _lambda_.1
$region0: #{_lambda_.1}
  #allocation0 [shape = 'u32[]', space=smem, size = 0x4, offset = 0x4, fixed_abs, tag = 'smem constant byte address 0x4 - core index']
  #allocation1 [shape = 'u32[144,128]{1,0:T(1,128)}', space=vmem, size = 0x12000, scoped, tag = 'internal scratch']
  %s0 = inlined_call_operand.vmem [shape: bf16[128,128], index: 0, kind: input, shape index: {}]
  %s1 = inlined_call_operand.hbm [shape: bf16[128,128], index: 1, kind: input, shape index: {}]
  %s2 = inlined_call_operand.hbm [shape: bf16[128,128], index: 2, kind: input, shape index: {}]
  %s3 = inlined_call_operand.vmem [shape: bf16[128,128], index: 3, kind: input, shape index: {}]
  %s4 = inlined_call_operand.vmem [shape: f32[1,128], index: 4, kind: input, shape index: {}, may-alias: {4,8}]
  %s5 = inlined_call_operand.vmem [shape: bf16[128,128], index: 5, kind: input, shape index: {}]
  %s6 = inlined_call_operand.vmem [shape: bf16[128,128], index: 6, kind: input, shape index: {}]
  %s7 = inlined_call_operand.vmem [shape: bf16[128,128], index: 7, kind: input, shape index: {}]
  %s8 = inlined_call_operand.vmem [shape: f32[1,128], index: 8, kind: input, shape index: {}, may-alias: {4,8}]
  %s9 = inlined_call_operand.vmem [shape: f32[128,128], index: 9, kind: output, shape index: {}]
  %s10 = sld [smem:[#allocation0]]
  $region54: #{_lambda_.1} parent=0
    _
  %s12 = ssub.s32 1, %s10
  %s13 = scalar_select 0, %s12, %s10
  $region1: #{_lambda_.1} parent=0
    #allocation2 [shape = 'u8[32768]{0}', space=vmem, size = 0x8000, scoped, tag = 'input window, operand 1, single buffered']
    #allocation3 [shape = 's32[1]{0}', space=sflag, size = 0x4, scoped, tag = 'scoped memory for _lambda_.1']
    #allocation4 [shape = 'u8[32768]{0}', space=vmem, size = 0x8000, scoped, tag = 'input window, operand 2, single buffered']
    #allocation5 [shape = 's32[1]{0}', space=sflag, size = 0x4, scoped, tag = 'scoped memory for _lambda_.1']
    %14 = vsyncpa [#allocation3], 0
    %15 = vsyncpa [#allocation5], 0
    // Predicated region
    $region2: #{_lambda_.1} parent=1 // pred_check
      _
    $region3: #{_lambda_.1} parent=1 // pred_check_branch
      %17 = sbr.rel (0) target = $region5
    $region4: #{_lambda_.1} parent=1 // pred_region
      _
    $region5: #{_lambda_.1} parent=1 // pred_fallthru
      _
    // Predicated region
    $region6: #{_lambda_.1} parent=1 // pred_check
      _
    $region7: #{_lambda_.1} parent=1 // pred_check_branch
      %19 = sbr.rel (0) target = $region9
    $region8: #{_lambda_.1} parent=1 // pred_region
      %s21 = ssub.s32 1024, 1024
      %22 = vsyncadd [#allocation3], %s21
      %s23 = sshll.u32 [#allocation2], 4
      %s24 = int_to_ptr.vmem [resolvable:$true] %s23
      %29 = dma.hbm_to_vmem [thread:$0]  %s1, 1024, %s24, [#allocation3], 64, 64, 4
    $region9: #{_lambda_.1} parent=1 // pred_fallthru
      _
    // Predicated region
    $region10: #{_lambda_.1} parent=1 // pred_check
      _
    $region11: #{_lambda_.1} parent=1 // pred_check_branch
      %31 = sbr.rel (0) target = $region13
    $region12: #{_lambda_.1} parent=1 // pred_region
      %s33 = ssub.s32 1024, 1024
      %34 = vsyncadd [#allocation5], %s33
      %s35 = sshll.u32 [#allocation4], 4
      %s36 = int_to_ptr.vmem [resolvable:$true] %s35
      %41 = dma.hbm_to_vmem [thread:$0]  %s2, 1024, %s36, [#allocation5], 64, 64, 4
    $region13: #{_lambda_.1} parent=1 // pred_fallthru
      _
    // Predicated region
    $region14: #{_lambda_.1} parent=1 // pred_check
      _
    $region15: #{_lambda_.1} parent=1 // pred_check_branch
      %43 = sbr.rel (0) target = $region17
    $region16: #{_lambda_.1} parent=1 // pred_region
      _
    $region17: #{_lambda_.1} parent=1 // pred_fallthru
      _
    // Predicated region
    $region18: #{_lambda_.1} parent=1 // pred_check
      _
    $region19: #{_lambda_.1} parent=1 // pred_check_branch
      %45 = sbr.rel (0) target = $region21
    $region20: #{_lambda_.1} parent=1 // pred_region
      _
    $region21: #{_lambda_.1} parent=1 // pred_fallthru
      _
    // Predicated region
    $region22: #{_lambda_.1} parent=1 // pred_check
      _
    $region23: #{_lambda_.1} parent=1 // pred_check_branch
      %47 = sbr.rel (0) target = $region25
    $region24: #{_lambda_.1} parent=1 // pred_region
      _
    $region25: #{_lambda_.1} parent=1 // pred_fallthru
      _
    // Predicated region
    $region26: #{_lambda_.1} parent=1 // pred_check
      _
    $region27: #{_lambda_.1} parent=1 // pred_check_branch
      %49 = sbr.rel (0) target = $region29
    $region28: #{_lambda_.1} parent=1 // pred_region
      _
    $region29: #{_lambda_.1} parent=1 // pred_fallthru
      _
    // Predicated region
    $region30: #{_lambda_.1} parent=1 // pred_check
      _
    $region31: #{_lambda_.1} parent=1 // pred_check_branch
      %51 = sbr.rel (0) target = $region33
    $region32: #{_lambda_.1} parent=1 // pred_region
      _
    $region33: #{_lambda_.1} parent=1 // pred_fallthru
      _
    // Predicated region
    $region34: #{_lambda_.1} parent=1 // pred_check
      _
    $region35: #{_lambda_.1} parent=1 // pred_check_branch
      %53 = sbr.rel (0) target = $region37
    $region36: #{_lambda_.1} parent=1 // pred_region
      _
    $region37: #{_lambda_.1} parent=1 // pred_fallthru
      _
    // Predicated region
    $region38: #{_lambda_.1} parent=1 // pred_check
      _
    $region39: #{_lambda_.1} parent=1 // pred_check_branch
      %55 = sbr.rel (0) target = $region41
    $region40: #{_lambda_.1} parent=1 // pred_region
      %56 = dma.done [#allocation3], 1024
    $region41: #{_lambda_.1} parent=1 // pred_fallthru
      _
    // Predicated region
    $region42: #{_lambda_.1} parent=1 // pred_check
      _
    $region43: #{_lambda_.1} parent=1 // pred_check_branch
      %58 = sbr.rel (0) target = $region45
    $region44: #{_lambda_.1} parent=1 // pred_region
      %59 = dma.done [#allocation5], 1024
    $region45: #{_lambda_.1} parent=1 // pred_fallthru
      _
    %v61 = vld [vmem:[%s0] sm:$0xf]
    %v62 = vld [vmem:[%s0 + $0x4] sm:$0xf]
    %v63 = vld [vmem:[%s0 + $0x8] sm:$0xf]
    %v64 = vld [vmem:[%s0 + $0xc] sm:$0xf]
    %v65 = vld [vmem:[%s0 + $0x10] sm:$0xf]
    %v66 = vld [vmem:[%s0 + $0x14] sm:$0xf]
    %v67 = vld [vmem:[%s0 + $0x18] sm:$0xf]
    %v68 = vld [vmem:[%s0 + $0x1c] sm:$0xf]
    %v69 = vld [vmem:[%s0 + $0x20] sm:$0xf]
    %v70 = vld [vmem:[%s0 + $0x24] sm:$0xf]
    %v71 = vld [vmem:[%s0 + $0x28] sm:$0xf]
    %v72 = vld [vmem:[%s0 + $0x2c] sm:$0xf]
    %v73 = vld [vmem:[%s0 + $0x30] sm:$0xf]
    %v74 = vld [vmem:[%s0 + $0x34] sm:$0xf]
    %v75 = vld [vmem:[%s0 + $0x38] sm:$0xf]
    %v76 = vld [vmem:[%s0 + $0x3c] sm:$0xf]
    %v77 = vld [vmem:[#allocation2] sm:$0xf]
    %v78 = vld [vmem:[#allocation2 + $0x4] sm:$0xf]
    %v79 = vld [vmem:[#allocation2 + $0x8] sm:$0xf]
    %v80 = vld [vmem:[#allocation2 + $0xc] sm:$0xf]
    %v81 = vld [vmem:[#allocation2 + $0x10] sm:$0xf]
    %v82 = vld [vmem:[#allocation2 + $0x14] sm:$0xf]
    %v83 = vld [vmem:[#allocation2 + $0x18] sm:$0xf]
    %v84 = vld [vmem:[#allocation2 + $0x1c] sm:$0xf]
    %v85 = vld [vmem:[#allocation2 + $0x20] sm:$0xf]
    %v86 = vld [vmem:[#allocation2 + $0x24] sm:$0xf]
    %v87 = vld [vmem:[#allocation2 + $0x28] sm:$0xf]
    %v88 = vld [vmem:[#allocation2 + $0x2c] sm:$0xf]
    %v89 = vld [vmem:[#allocation2 + $0x30] sm:$0xf]
    %v90 = vld [vmem:[#allocation2 + $0x34] sm:$0xf]
    %v91 = vld [vmem:[#allocation2 + $0x38] sm:$0xf]
    %v92 = vld [vmem:[#allocation2 + $0x3c] sm:$0xf]
    %v109 = vunpack.c.l.b16 %v77
    %v110 = vunpack.c.l.b16 %v78
    %v111 = vunpack.c.l.b16 %v79
    %v112 = vunpack.c.l.b16 %v80
    %v113 = vunpack.c.l.b16 %v81
    %v114 = vunpack.c.l.b16 %v82
    %v115 = vunpack.c.l.b16 %v83
    %v116 = vunpack.c.l.b16 %v84
    %v117 = vunpack.c.l.b16 %v85
    %v118 = vunpack.c.l.b16 %v86
    %v119 = vunpack.c.l.b16 %v87
    %v120 = vunpack.c.l.b16 %v88
    %v121 = vunpack.c.l.b16 %v89
    %v122 = vunpack.c.l.b16 %v90
    %v123 = vunpack.c.l.b16 %v91
    %v124 = vunpack.c.l.b16 %v92
    %v125 = vpack.c.b16 %v110, %v109
    %v126 = vpack.c.b16 %v112, %v111
    %v127 = vpack.c.b16 %v114, %v113
    %v128 = vpack.c.b16 %v116, %v115
    %v129 = vpack.c.b16 %v118, %v117
    %v130 = vpack.c.b16 %v120, %v119
    %v131 = vpack.c.b16 %v122, %v121
    %v132 = vpack.c.b16 %v124, %v123
    %v157 = vunpack.c.l.b16 %v61
    %v158 = vunpack.c.l.b16 %v62
    %v159 = vunpack.c.l.b16 %v63
    %v160 = vunpack.c.l.b16 %v64
    %v161 = vunpack.c.l.b16 %v65
    %v162 = vunpack.c.l.b16 %v66
    %v163 = vunpack.c.l.b16 %v67
    %v164 = vunpack.c.l.b16 %v68
    %v165 = vunpack.c.l.b16 %v69
    %v166 = vunpack.c.l.b16 %v70
    %v167 = vunpack.c.l.b16 %v71
    %v168 = vunpack.c.l.b16 %v72
    %v169 = vunpack.c.l.b16 %v73
    %v170 = vunpack.c.l.b16 %v74
    %v171 = vunpack.c.l.b16 %v75
    %v172 = vunpack.c.l.b16 %v76
    %v173 = vpack.c.b16 %v158, %v157
    %v174 = vpack.c.b16 %v160, %v159
    %v175 = vpack.c.b16 %v162, %v161
    %v176 = vpack.c.b16 %v164, %v163
    %v177 = vpack.c.b16 %v166, %v165
    %v178 = vpack.c.b16 %v168, %v167
    %v179 = vpack.c.b16 %v170, %v169
    %v180 = vpack.c.b16 %v172, %v171
    %189 = vmatprep.subr.bf16.mxu0 0
    %190 = vmatpush1.bf16.msra.mxu0 %v180
    %191 = vmatprep.subr.bf16.mxu0 0
    %192 = vmatpush1.bf16.msra.mxu0 %v179
    %193 = vmatprep.subr.bf16.mxu0 0
    %194 = vmatpush1.bf16.msra.mxu0 %v178
    %195 = vmatprep.subr.bf16.mxu0 0
    %196 = vmatpush1.bf16.msra.mxu0 %v177
    %197 = vmatprep.subr.bf16.mxu0 0
    %198 = vmatpush1.bf16.msra.mxu0 %v176
    %199 = vmatprep.subr.bf16.mxu0 0
    %200 = vmatpush1.bf16.msra.mxu0 %v175
    %201 = vmatprep.subr.bf16.mxu0 0
    %202 = vmatpush1.bf16.msra.mxu0 %v174
    %203 = vmatprep.subr.bf16.mxu0 0
    %204 = vmatpush1.bf16.msra.mxu0 %v173
    %205 = vmatprep.subr.bf16.mxu0 0
    %206 = vmatpush2.bf16.msra.mxu0 0
    %207 = vmatprep.subr.bf16.mxu0 0
    %208 = vmatpush2.bf16.msra.mxu0 0
    %209 = vmatprep.subr.bf16.mxu0 0
    %210 = vmatpush2.bf16.msra.mxu0 0
    %211 = vmatprep.subr.bf16.mxu0 0
    %212 = vmatpush2.bf16.msra.mxu0 0
    %213 = vmatprep.subr.bf16.mxu0 0
    %214 = vmatpush2.bf16.msra.mxu0 0
    %215 = vmatprep.subr.bf16.mxu0 0
    %216 = vmatpush2.bf16.msra.mxu0 0
    %217 = vmatprep.subr.bf16.mxu0 0
    %218 = vmatpush2.bf16.msra.mxu0 0
    %219 = vmatprep.subr.bf16.mxu0 0
    %220 = vmatpush2.bf16.msra.mxu0 0
    %221 = vmatprep.mubr.bf16.mxu0 0
    %222 = vmatmul.mubr.bf16.gmra.mxu0 %v125
    %v223 = vpop.f32.mrf.mxu0
    %v224 = vadd.f32 0.0, %v223
    %v225 = vpop.f32.mrf.mxu0
    %v226 = vpop.f32.mrf.mxu0
    %v227 = vadd.f32 0.0, %v226
    %v228 = vpop.f32.mrf.mxu0
    %229 = vmatprep.mubr.bf16.mxu0 0
    %230 = vmatmul.mubr.bf16.gmra.mxu0 %v126
    %v231 = vpop.f32.mrf.mxu0
    %v232 = vadd.f32 0.0, %v231
    %v233 = vpop.f32.mrf.mxu0
    %v234 = vpop.f32.mrf.mxu0
    %v235 = vadd.f32 0.0, %v234
    %v236 = vpop.f32.mrf.mxu0
    %237 = vmatprep.mubr.bf16.mxu0 0
    %238 = vmatmul.mubr.bf16.gmra.mxu0 %v127
    %v239 = vpop.f32.mrf.mxu0
    %v240 = vadd.f32 0.0, %v239
    %v241 = vpop.f32.mrf.mxu0
    %v242 = vpop.f32.mrf.mxu0
    %v243 = vadd.f32 0.0, %v242
    %v244 = vpop.f32.mrf.mxu0
    %245 = vmatprep.mubr.bf16.mxu0 0
    %246 = vmatmul.mubr.bf16.gmra.mxu0 %v128
    %v247 = vpop.f32.mrf.mxu0
    %v248 = vadd.f32 0.0, %v247
    %v249 = vpop.f32.mrf.mxu0
    %v250 = vpop.f32.mrf.mxu0
    %v251 = vadd.f32 0.0, %v250
    %v252 = vpop.f32.mrf.mxu0
    %253 = vmatprep.mubr.bf16.mxu0 0
    %254 = vmatmul.mubr.bf16.gmra.mxu0 %v129
    %v255 = vpop.f32.mrf.mxu0
    %v256 = vadd.f32 0.0, %v255
    %v257 = vpop.f32.mrf.mxu0
    %v258 = vpop.f32.mrf.mxu0
    %v259 = vadd.f32 0.0, %v258
    %v260 = vpop.f32.mrf.mxu0
    %261 = vmatprep.mubr.bf16.mxu0 0
    %262 = vmatmul.mubr.bf16.gmra.mxu0 %v130
    %v263 = vpop.f32.mrf.mxu0
    %v264 = vadd.f32 0.0, %v263
    %v265 = vpop.f32.mrf.mxu0
    %v266 = vpop.f32.mrf.mxu0
    %v267 = vadd.f32 0.0, %v266
    %v268 = vpop.f32.mrf.mxu0
    %269 = vmatprep.mubr.bf16.mxu0 0
    %270 = vmatmul.mubr.bf16.gmra.mxu0 %v131
    %v271 = vpop.f32.mrf.mxu0
    %v272 = vadd.f32 0.0, %v271
    %v273 = vpop.f32.mrf.mxu0
    %v274 = vpop.f32.mrf.mxu0
    %v275 = vadd.f32 0.0, %v274
    %v276 = vpop.f32.mrf.mxu0
    %277 = vmatprep.mubr.bf16.mxu0 0
    %278 = vmatmul.mubr.bf16.gmra.mxu0 %v132
    %v279 = vpop.f32.mrf.mxu0
    %v280 = vadd.f32 0.0, %v279
    %v281 = vpop.f32.mrf.mxu0
    %v282 = vpop.f32.mrf.mxu0
    %v283 = vadd.f32 0.0, %v282
    %v284 = vpop.f32.mrf.mxu0
    %285 = vdwg.mxu0
    %v286 = vmax.f32 %v224, 1.0
    %v287 = vmax.f32 %v227, 1.0
    %v288 = vmax.f32 %v232, 1.0
    %v289 = vmax.f32 %v235, 1.0
    %v290 = vmax.f32 %v240, 1.0
    %v291 = vmax.f32 %v243, 1.0
    %v292 = vmax.f32 %v248, 1.0
    %v293 = vmax.f32 %v251, 1.0
    %v294 = vmax.f32 %v256, 1.0
    %v295 = vmax.f32 %v259, 1.0
    %v296 = vmax.f32 %v264, 1.0
    %v297 = vmax.f32 %v267, 1.0
    %v298 = vmax.f32 %v272, 1.0
    %v299 = vmax.f32 %v275, 1.0
    %v300 = vmax.f32 %v280, 1.0
    %v301 = vmax.f32 %v283, 1.0
    %303 = vset.pattern.permute.xlu0 8
    %304 = vperm.xlu0 %303, %v286
    %v305 = vpop.permute.xlu0 %304
    %308 = vset.pattern.permute.xlu0 8
    %309 = vperm.xlu0 %308, %v287
    %v310 = vpop.permute.xlu0 %309
    %313 = vset.pattern.permute.xlu0 8
    %314 = vperm.xlu0 %313, %v288
    %v315 = vpop.permute.xlu0 %314
    %318 = vset.pattern.permute.xlu0 8
    %319 = vperm.xlu0 %318, %v289
    %v320 = vpop.permute.xlu0 %319
    %323 = vset.pattern.permute.xlu0 8
    %324 = vperm.xlu0 %323, %v290
    %v325 = vpop.permute.xlu0 %324
    %328 = vset.pattern.permute.xlu0 8
    %329 = vperm.xlu0 %328, %v291
    %v330 = vpop.permute.xlu0 %329
    %333 = vset.pattern.permute.xlu0 8
    %334 = vperm.xlu0 %333, %v292
    %v335 = vpop.permute.xlu0 %334
    %338 = vset.pattern.permute.xlu0 8
    %339 = vperm.xlu0 %338, %v293
    %v340 = vpop.permute.xlu0 %339
    %343 = vset.pattern.permute.xlu0 8
    %344 = vperm.xlu0 %343, %v294
    %v345 = vpop.permute.xlu0 %344
    %348 = vset.pattern.permute.xlu0 8
    %349 = vperm.xlu0 %348, %v295
    %v350 = vpop.permute.xlu0 %349
    %353 = vset.pattern.permute.xlu0 8
    %354 = vperm.xlu0 %353, %v296
    %v355 = vpop.permute.xlu0 %354
    %358 = vset.pattern.permute.xlu0 8
    %359 = vperm.xlu0 %358, %v297
    %v360 = vpop.permute.xlu0 %359
    %363 = vset.pattern.permute.xlu0 8
    %364 = vperm.xlu0 %363, %v298
    %v365 = vpop.permute.xlu0 %364
    %368 = vset.pattern.permute.xlu0 8
    %369 = vperm.xlu0 %368, %v299
    %v370 = vpop.permute.xlu0 %369
    %373 = vset.pattern.permute.xlu0 8
    %374 = vperm.xlu0 %373, %v300
    %v375 = vpop.permute.xlu0 %374
    %378 = vset.pattern.permute.xlu0 8
    %379 = vperm.xlu0 %378, %v301
    %v380 = vpop.permute.xlu0 %379
    %v382 = vrcp.pop %v305
    %v383 = vmul.f32 %v224, %v382
    %v384 = vrcp.pop %v310
    %v385 = vmul.f32 %v227, %v384
    %v386 = vrcp.pop %v315
    %v387 = vmul.f32 %v232, %v386
    %v388 = vrcp.pop %v320
    %v389 = vmul.f32 %v235, %v388
    %v390 = vrcp.pop %v325
    %v391 = vmul.f32 %v240, %v390
    %v392 = vrcp.pop %v330
    %v393 = vmul.f32 %v243, %v392
    %v394 = vrcp.pop %v335
    %v395 = vmul.f32 %v248, %v394
    %v396 = vrcp.pop %v340
    %v397 = vmul.f32 %v251, %v396
    %v398 = vrcp.pop %v345
    %v399 = vmul.f32 %v256, %v398
    %v400 = vrcp.pop %v350
    %v401 = vmul.f32 %v259, %v400
    %v402 = vrcp.pop %v355
    %v403 = vmul.f32 %v264, %v402
    %v404 = vrcp.pop %v360
    %v405 = vmul.f32 %v267, %v404
    %v406 = vrcp.pop %v365
    %v407 = vmul.f32 %v272, %v406
    %v408 = vrcp.pop %v370
    %v409 = vmul.f32 %v275, %v408
    %v410 = vrcp.pop %v375
    %v411 = vmul.f32 %v280, %v410
    %v412 = vrcp.pop %v380
    %v413 = vmul.f32 %v283, %v412
    %v414 = vpack.c.bf16 %v385, %v383
    %v415 = vpack.c.bf16 %v389, %v387
    %v416 = vpack.c.bf16 %v393, %v391
    %v417 = vpack.c.bf16 %v397, %v395
    %v418 = vpack.c.bf16 %v401, %v399
    %v419 = vpack.c.bf16 %v405, %v403
    %v420 = vpack.c.bf16 %v409, %v407
    %v421 = vpack.c.bf16 %v413, %v411
    %v422 = vld [vmem:[#allocation4] sm:$0xf]
    %v423 = vld [vmem:[#allocation4 + $0x4] sm:$0xf]
    %v424 = vld [vmem:[#allocation4 + $0x8] sm:$0xf]
    %v425 = vld [vmem:[#allocation4 + $0xc] sm:$0xf]
    %v426 = vld [vmem:[#allocation4 + $0x10] sm:$0xf]
    %v427 = vld [vmem:[#allocation4 + $0x14] sm:$0xf]
    %v428 = vld [vmem:[#allocation4 + $0x18] sm:$0xf]
    %v429 = vld [vmem:[#allocation4 + $0x1c] sm:$0xf]
    %v430 = vld [vmem:[#allocation4 + $0x20] sm:$0xf]
    %v431 = vld [vmem:[#allocation4 + $0x24] sm:$0xf]
    %v432 = vld [vmem:[#allocation4 + $0x28] sm:$0xf]
    %v433 = vld [vmem:[#allocation4 + $0x2c] sm:$0xf]
    %v434 = vld [vmem:[#allocation4 + $0x30] sm:$0xf]
    %v435 = vld [vmem:[#allocation4 + $0x34] sm:$0xf]
    %v436 = vld [vmem:[#allocation4 + $0x38] sm:$0xf]
    %v437 = vld [vmem:[#allocation4 + $0x3c] sm:$0xf]
    %v438 = vld [vmem:[%s3] sm:$0xf]
    %v439 = vld [vmem:[%s3 + $0x4] sm:$0xf]
    %v440 = vld [vmem:[%s3 + $0x8] sm:$0xf]
    %v441 = vld [vmem:[%s3 + $0xc] sm:$0xf]
    %v442 = vld [vmem:[%s3 + $0x10] sm:$0xf]
    %v443 = vld [vmem:[%s3 + $0x14] sm:$0xf]
    %v444 = vld [vmem:[%s3 + $0x18] sm:$0xf]
    %v445 = vld [vmem:[%s3 + $0x1c] sm:$0xf]
    %v446 = vld [vmem:[%s3 + $0x20] sm:$0xf]
    %v447 = vld [vmem:[%s3 + $0x24] sm:$0xf]
    %v448 = vld [vmem:[%s3 + $0x28] sm:$0xf]
    %v449 = vld [vmem:[%s3 + $0x2c] sm:$0xf]
    %v450 = vld [vmem:[%s3 + $0x30] sm:$0xf]
    %v451 = vld [vmem:[%s3 + $0x34] sm:$0xf]
    %v452 = vld [vmem:[%s3 + $0x38] sm:$0xf]
    %v453 = vld [vmem:[%s3 + $0x3c] sm:$0xf]
    %v470 = vunpack.c.l.b16 %v438
    %v471 = vunpack.c.l.b16 %v439
    %v472 = vunpack.c.l.b16 %v440
    %v473 = vunpack.c.l.b16 %v441
    %v474 = vunpack.c.l.b16 %v442
    %v475 = vunpack.c.l.b16 %v443
    %v476 = vunpack.c.l.b16 %v444
    %v477 = vunpack.c.l.b16 %v445
    %v478 = vunpack.c.l.b16 %v446
    %v479 = vunpack.c.l.b16 %v447
    %v480 = vunpack.c.l.b16 %v448
    %v481 = vunpack.c.l.b16 %v449
    %v482 = vunpack.c.l.b16 %v450
    %v483 = vunpack.c.l.b16 %v451
    %v484 = vunpack.c.l.b16 %v452
    %v485 = vunpack.c.l.b16 %v453
    %v486 = vpack.c.b16 %v471, %v470
    %v487 = vpack.c.b16 %v473, %v472
    %v488 = vpack.c.b16 %v475, %v474
    %v489 = vpack.c.b16 %v477, %v476
    %v490 = vpack.c.b16 %v479, %v478
    %v491 = vpack.c.b16 %v481, %v480
    %v492 = vpack.c.b16 %v483, %v482
    %v493 = vpack.c.b16 %v485, %v484
    %502 = vmatprep.subr.bf16.mxu0 0
    %503 = vmatpush1.bf16.msra.mxu0 %v493
    %504 = vmatprep.subr.bf16.mxu0 0
    %505 = vmatpush1.bf16.msra.mxu0 %v492
    %506 = vmatprep.subr.bf16.mxu0 0
    %507 = vmatpush1.bf16.msra.mxu0 %v491
    %508 = vmatprep.subr.bf16.mxu0 0
    %509 = vmatpush1.bf16.msra.mxu0 %v490
    %510 = vmatprep.subr.bf16.mxu0 0
    %511 = vmatpush1.bf16.msra.mxu0 %v489
    %512 = vmatprep.subr.bf16.mxu0 0
    %513 = vmatpush1.bf16.msra.mxu0 %v488
    %514 = vmatprep.subr.bf16.mxu0 0
    %515 = vmatpush1.bf16.msra.mxu0 %v487
    %516 = vmatprep.subr.bf16.mxu0 0
    %517 = vmatpush1.bf16.msra.mxu0 %v486
    %518 = vmatprep.subr.bf16.mxu0 0
    %519 = vmatpush2.bf16.msra.mxu0 0
    %520 = vmatprep.subr.bf16.mxu0 0
    %521 = vmatpush2.bf16.msra.mxu0 0
    %522 = vmatprep.subr.bf16.mxu0 0
    %523 = vmatpush2.bf16.msra.mxu0 0
    %524 = vmatprep.subr.bf16.mxu0 0
    %525 = vmatpush2.bf16.msra.mxu0 0
    %526 = vmatprep.subr.bf16.mxu0 0
    %527 = vmatpush2.bf16.msra.mxu0 0
    %528 = vmatprep.subr.bf16.mxu0 0
    %529 = vmatpush2.bf16.msra.mxu0 0
    %530 = vmatprep.subr.bf16.mxu0 0
    %531 = vmatpush2.bf16.msra.mxu0 0
    %532 = vmatprep.subr.bf16.mxu0 0
    %533 = vmatpush2.bf16.msra.mxu0 0
    %534 = vmatprep.mubr.bf16.mxu0 0
    %535 = vmatmul.mubr.bf16.gmra.mxu0 %v414
    %v536 = vpop.f32.mrf.mxu0
    %v537 = vadd.f32 0.0, %v536
    %v538 = vpop.f32.mrf.mxu0
    %v539 = vpop.f32.mrf.mxu0
    %v540 = vadd.f32 0.0, %v539
    %v541 = vpop.f32.mrf.mxu0
    %542 = vmatprep.mubr.bf16.mxu0 0
    %543 = vmatmul.mubr.bf16.gmra.mxu0 %v415
    %v544 = vpop.f32.mrf.mxu0
    %v545 = vadd.f32 0.0, %v544
    %v546 = vpop.f32.mrf.mxu0
    %v547 = vpop.f32.mrf.mxu0
    %v548 = vadd.f32 0.0, %v547
    %v549 = vpop.f32.mrf.mxu0
    %550 = vmatprep.mubr.bf16.mxu0 0
    %551 = vmatmul.mubr.bf16.gmra.mxu0 %v416
    %v552 = vpop.f32.mrf.mxu0
    %v553 = vadd.f32 0.0, %v552
    %v554 = vpop.f32.mrf.mxu0
    %v555 = vpop.f32.mrf.mxu0
    %v556 = vadd.f32 0.0, %v555
    %v557 = vpop.f32.mrf.mxu0
    %558 = vmatprep.mubr.bf16.mxu0 0
    %559 = vmatmul.mubr.bf16.gmra.mxu0 %v417
    %v560 = vpop.f32.mrf.mxu0
    %v561 = vadd.f32 0.0, %v560
    %v562 = vpop.f32.mrf.mxu0
    %v563 = vpop.f32.mrf.mxu0
    %v564 = vadd.f32 0.0, %v563
    %v565 = vpop.f32.mrf.mxu0
    %566 = vmatprep.mubr.bf16.mxu0 0
    %567 = vmatmul.mubr.bf16.gmra.mxu0 %v418
    %v568 = vpop.f32.mrf.mxu0
    %v569 = vadd.f32 0.0, %v568
    %v570 = vpop.f32.mrf.mxu0
    %v571 = vpop.f32.mrf.mxu0
    %v572 = vadd.f32 0.0, %v571
    %v573 = vpop.f32.mrf.mxu0
    %574 = vmatprep.mubr.bf16.mxu0 0
    %575 = vmatmul.mubr.bf16.gmra.mxu0 %v419
    %v576 = vpop.f32.mrf.mxu0
    %v577 = vadd.f32 0.0, %v576
    %v578 = vpop.f32.mrf.mxu0
    %v579 = vpop.f32.mrf.mxu0
    %v580 = vadd.f32 0.0, %v579
    %v581 = vpop.f32.mrf.mxu0
    %582 = vmatprep.mubr.bf16.mxu0 0
    %583 = vmatmul.mubr.bf16.gmra.mxu0 %v420
    %v584 = vpop.f32.mrf.mxu0
    %v585 = vadd.f32 0.0, %v584
    %v586 = vpop.f32.mrf.mxu0
    %v587 = vpop.f32.mrf.mxu0
    %v588 = vadd.f32 0.0, %v587
    %v589 = vpop.f32.mrf.mxu0
    %590 = vmatprep.mubr.bf16.mxu0 0
    %591 = vmatmul.mubr.bf16.gmra.mxu0 %v421
    %v592 = vpop.f32.mrf.mxu0
    %v593 = vadd.f32 0.0, %v592
    %v594 = vpop.f32.mrf.mxu0
    %v595 = vpop.f32.mrf.mxu0
    %v596 = vadd.f32 0.0, %v595
    %v597 = vpop.f32.mrf.mxu0
    %598 = vdwg.mxu0
    %v615 = vunpack.c.l.b16 %v422
    %v616 = vunpack.c.l.b16 %v423
    %v617 = vunpack.c.l.b16 %v424
    %v618 = vunpack.c.l.b16 %v425
    %v619 = vunpack.c.l.b16 %v426
    %v620 = vunpack.c.l.b16 %v427
    %v621 = vunpack.c.l.b16 %v428
    %v622 = vunpack.c.l.b16 %v429
    %v623 = vunpack.c.l.b16 %v430
    %v624 = vunpack.c.l.b16 %v431
    %v625 = vunpack.c.l.b16 %v432
    %v626 = vunpack.c.l.b16 %v433
    %v627 = vunpack.c.l.b16 %v434
    %v628 = vunpack.c.l.b16 %v435
    %v629 = vunpack.c.l.b16 %v436
    %v630 = vunpack.c.l.b16 %v437
    %v631 = vpack.c.b16 %v616, %v615
    %v632 = vpack.c.b16 %v618, %v617
    %v633 = vpack.c.b16 %v620, %v619
    %v634 = vpack.c.b16 %v622, %v621
    %v635 = vpack.c.b16 %v624, %v623
    %v636 = vpack.c.b16 %v626, %v625
    %v637 = vpack.c.b16 %v628, %v627
    %v638 = vpack.c.b16 %v630, %v629
    %647 = vmatprep.subr.bf16.mxu0 0
    %648 = vmatpush1.bf16.msra.mxu0 %v638
    %649 = vmatprep.subr.bf16.mxu0 0
    %650 = vmatpush1.bf16.msra.mxu0 %v637
    %651 = vmatprep.subr.bf16.mxu0 0
    %652 = vmatpush1.bf16.msra.mxu0 %v636
    %653 = vmatprep.subr.bf16.mxu0 0
    %654 = vmatpush1.bf16.msra.mxu0 %v635
    %655 = vmatprep.subr.bf16.mxu0 0
    %656 = vmatpush1.bf16.msra.mxu0 %v634
    %657 = vmatprep.subr.bf16.mxu0 0
    %658 = vmatpush1.bf16.msra.mxu0 %v633
    %659 = vmatprep.subr.bf16.mxu0 0
    %660 = vmatpush1.bf16.msra.mxu0 %v632
    %661 = vmatprep.subr.bf16.mxu0 0
    %662 = vmatpush1.bf16.msra.mxu0 %v631
    %663 = vmatprep.subr.bf16.mxu0 0
    %664 = vmatpush2.bf16.msra.mxu0 0
    %665 = vmatprep.subr.bf16.mxu0 0
    %666 = vmatpush2.bf16.msra.mxu0 0
    %667 = vmatprep.subr.bf16.mxu0 0
    %668 = vmatpush2.bf16.msra.mxu0 0
    %669 = vmatprep.subr.bf16.mxu0 0
    %670 = vmatpush2.bf16.msra.mxu0 0
    %671 = vmatprep.subr.bf16.mxu0 0
    %672 = vmatpush2.bf16.msra.mxu0 0
    %673 = vmatprep.subr.bf16.mxu0 0
    %674 = vmatpush2.bf16.msra.mxu0 0
    %675 = vmatprep.subr.bf16.mxu0 0
    %676 = vmatpush2.bf16.msra.mxu0 0
    %677 = vmatprep.subr.bf16.mxu0 0
    %678 = vmatpush2.bf16.msra.mxu0 0
    %679 = vmatprep.mubr.bf16.mxu0 0
    %680 = vmatmul.mubr.bf16.gmra.mxu0 %v173
    %v681 = vpop.f32.mrf.mxu0
    %v682 = vadd.f32 %v537, %v681
    %v683 = vpop.f32.mrf.mxu0
    %v684 = vpop.f32.mrf.mxu0
    %v685 = vadd.f32 %v540, %v684
    %v686 = vpop.f32.mrf.mxu0
    %687 = vmatprep.mubr.bf16.mxu0 0
    %688 = vmatmul.mubr.bf16.gmra.mxu0 %v174
    %v689 = vpop.f32.mrf.mxu0
    %v690 = vadd.f32 %v545, %v689
    %v691 = vpop.f32.mrf.mxu0
    %v692 = vpop.f32.mrf.mxu0
    %v693 = vadd.f32 %v548, %v692
    %v694 = vpop.f32.mrf.mxu0
    %695 = vmatprep.mubr.bf16.mxu0 0
    %696 = vmatmul.mubr.bf16.gmra.mxu0 %v175
    %v697 = vpop.f32.mrf.mxu0
    %v698 = vadd.f32 %v553, %v697
    %v699 = vpop.f32.mrf.mxu0
    %v700 = vpop.f32.mrf.mxu0
    %v701 = vadd.f32 %v556, %v700
    %v702 = vpop.f32.mrf.mxu0
    %703 = vmatprep.mubr.bf16.mxu0 0
    %704 = vmatmul.mubr.bf16.gmra.mxu0 %v176
    %v705 = vpop.f32.mrf.mxu0
    %v706 = vadd.f32 %v561, %v705
    %v707 = vpop.f32.mrf.mxu0
    %v708 = vpop.f32.mrf.mxu0
    %v709 = vadd.f32 %v564, %v708
    %v710 = vpop.f32.mrf.mxu0
    %711 = vmatprep.mubr.bf16.mxu0 0
    %712 = vmatmul.mubr.bf16.gmra.mxu0 %v177
    %v713 = vpop.f32.mrf.mxu0
    %v714 = vadd.f32 %v569, %v713
    %v715 = vpop.f32.mrf.mxu0
    %v716 = vpop.f32.mrf.mxu0
    %v717 = vadd.f32 %v572, %v716
    %v718 = vpop.f32.mrf.mxu0
    %719 = vmatprep.mubr.bf16.mxu0 0
    %720 = vmatmul.mubr.bf16.gmra.mxu0 %v178
    %v721 = vpop.f32.mrf.mxu0
    %v722 = vadd.f32 %v577, %v721
    %v723 = vpop.f32.mrf.mxu0
    %v724 = vpop.f32.mrf.mxu0
    %v725 = vadd.f32 %v580, %v724
    %v726 = vpop.f32.mrf.mxu0
    %727 = vmatprep.mubr.bf16.mxu0 0
    %728 = vmatmul.mubr.bf16.gmra.mxu0 %v179
    %v729 = vpop.f32.mrf.mxu0
    %v730 = vadd.f32 %v585, %v729
    %v731 = vpop.f32.mrf.mxu0
    %v732 = vpop.f32.mrf.mxu0
    %v733 = vadd.f32 %v588, %v732
    %v734 = vpop.f32.mrf.mxu0
    %735 = vmatprep.mubr.bf16.mxu0 0
    %736 = vmatmul.mubr.bf16.gmra.mxu0 %v180
    %v737 = vpop.f32.mrf.mxu0
    %v738 = vadd.f32 %v593, %v737
    %v739 = vpop.f32.mrf.mxu0
    %v740 = vpop.f32.mrf.mxu0
    %v741 = vadd.f32 %v596, %v740
    %v742 = vpop.f32.mrf.mxu0
    %743 = vdwg.mxu0
    %v744 = vld [vmem:[%s4] sm:$0x1]
    %v746 = vlaneseq
    %v747 = vshrl.u32 %v746, 7
    %v748 = vsub.s32 0, %v747
    %v749 = vrot.slane %v744, %v748
    %v751 = vadd.f32 %v682, %v749
    %v752 = vadd.f32 %v685, %v749
    %v753 = vadd.f32 %v690, %v749
    %v754 = vadd.f32 %v693, %v749
    %v755 = vadd.f32 %v698, %v749
    %v756 = vadd.f32 %v701, %v749
    %v757 = vadd.f32 %v706, %v749
    %v758 = vadd.f32 %v709, %v749
    %v759 = vadd.f32 %v714, %v749
    %v760 = vadd.f32 %v717, %v749
    %v761 = vadd.f32 %v722, %v749
    %v762 = vadd.f32 %v725, %v749
    %v763 = vadd.f32 %v730, %v749
    %v764 = vadd.f32 %v733, %v749
    %v765 = vadd.f32 %v738, %v749
    %v766 = vadd.f32 %v741, %v749
    %v767 = vmax.f32 %v751, 0.0
    %v768 = vmax.f32 %v752, 0.0
    %v769 = vmax.f32 %v753, 0.0
    %v770 = vmax.f32 %v754, 0.0
    %v771 = vmax.f32 %v755, 0.0
    %v772 = vmax.f32 %v756, 0.0
    %v773 = vmax.f32 %v757, 0.0
    %v774 = vmax.f32 %v758, 0.0
    %v775 = vmax.f32 %v759, 0.0
    %v776 = vmax.f32 %v760, 0.0
    %v777 = vmax.f32 %v761, 0.0
    %v778 = vmax.f32 %v762, 0.0
    %v779 = vmax.f32 %v763, 0.0
    %v780 = vmax.f32 %v764, 0.0
    %v781 = vmax.f32 %v765, 0.0
    %v782 = vmax.f32 %v766, 0.0
    %v783 = vlaneseq
    %v784 = vand.u32 %v783, 127
    %vm785 = vcmp.eq.s32.totalorder %v784, 32
    %v786 = vsel %vm785, 1.0, %v767
    %v787 = vsel %vm785, 1.0, %v768
    %v788 = vsel %vm785, 1.0, %v769
    %v789 = vsel %vm785, 1.0, %v770
    %v790 = vsel %vm785, 1.0, %v771
    %v791 = vsel %vm785, 1.0, %v772
    %v792 = vsel %vm785, 1.0, %v773
    %v793 = vsel %vm785, 1.0, %v774
    %v794 = vsel %vm785, 1.0, %v775
    %v795 = vsel %vm785, 1.0, %v776
    %v796 = vsel %vm785, 1.0, %v777
    %v797 = vsel %vm785, 1.0, %v778
    %v798 = vsel %vm785, 1.0, %v779
    %v799 = vsel %vm785, 1.0, %v780
    %v800 = vsel %vm785, 1.0, %v781
    %v801 = vsel %vm785, 1.0, %v782
    %v802 = vpack.c.bf16 %v787, %v786
    %v803 = vpack.c.bf16 %v789, %v788
    %v804 = vpack.c.bf16 %v791, %v790
    %v805 = vpack.c.bf16 %v793, %v792
    %v806 = vpack.c.bf16 %v795, %v794
    %v807 = vpack.c.bf16 %v797, %v796
    %v808 = vpack.c.bf16 %v799, %v798
    %v809 = vpack.c.bf16 %v801, %v800
    %v810 = vld [vmem:[%s5] sm:$0xf]
    %v811 = vld [vmem:[%s5 + $0x4] sm:$0xf]
    %v812 = vld [vmem:[%s5 + $0x8] sm:$0xf]
    %v813 = vld [vmem:[%s5 + $0xc] sm:$0xf]
    %v814 = vld [vmem:[%s5 + $0x10] sm:$0xf]
    %v815 = vld [vmem:[%s5 + $0x14] sm:$0xf]
    %v816 = vld [vmem:[%s5 + $0x18] sm:$0xf]
    %v817 = vld [vmem:[%s5 + $0x1c] sm:$0xf]
    %v818 = vld [vmem:[%s5 + $0x20] sm:$0xf]
    %v819 = vld [vmem:[%s5 + $0x24] sm:$0xf]
    %v820 = vld [vmem:[%s5 + $0x28] sm:$0xf]
    %v821 = vld [vmem:[%s5 + $0x2c] sm:$0xf]
    %v822 = vld [vmem:[%s5 + $0x30] sm:$0xf]
    %v823 = vld [vmem:[%s5 + $0x34] sm:$0xf]
    %v824 = vld [vmem:[%s5 + $0x38] sm:$0xf]
    %v825 = vld [vmem:[%s5 + $0x3c] sm:$0xf]
    %v842 = vunpack.c.l.b16 %v810
    %v843 = vunpack.c.l.b16 %v811
    %v844 = vunpack.c.l.b16 %v812
    %v845 = vunpack.c.l.b16 %v813
    %v846 = vunpack.c.l.b16 %v814
    %v847 = vunpack.c.l.b16 %v815
    %v848 = vunpack.c.l.b16 %v816
    %v849 = vunpack.c.l.b16 %v817
    %v850 = vunpack.c.l.b16 %v818
    %v851 = vunpack.c.l.b16 %v819
    %v852 = vunpack.c.l.b16 %v820
    %v853 = vunpack.c.l.b16 %v821
    %v854 = vunpack.c.l.b16 %v822
    %v855 = vunpack.c.l.b16 %v823
    %v856 = vunpack.c.l.b16 %v824
    %v857 = vunpack.c.l.b16 %v825
    %v858 = vpack.c.b16 %v843, %v842
    %v859 = vpack.c.b16 %v845, %v844
    %v860 = vpack.c.b16 %v847, %v846
    %v861 = vpack.c.b16 %v849, %v848
    %v862 = vpack.c.b16 %v851, %v850
    %v863 = vpack.c.b16 %v853, %v852
    %v864 = vpack.c.b16 %v855, %v854
    %v865 = vpack.c.b16 %v857, %v856
    %874 = vmatprep.subr.bf16.mxu0 0
    %875 = vmatpush1.bf16.msra.mxu0 %v809
    %876 = vmatprep.subr.bf16.mxu0 0
    %877 = vmatpush1.bf16.msra.mxu0 %v808
    %878 = vmatprep.subr.bf16.mxu0 0
    %879 = vmatpush1.bf16.msra.mxu0 %v807
    %880 = vmatprep.subr.bf16.mxu0 0
    %881 = vmatpush1.bf16.msra.mxu0 %v806
    %882 = vmatprep.subr.bf16.mxu0 0
    %883 = vmatpush1.bf16.msra.mxu0 %v805
    %884 = vmatprep.subr.bf16.mxu0 0
    %885 = vmatpush1.bf16.msra.mxu0 %v804
    %886 = vmatprep.subr.bf16.mxu0 0
    %887 = vmatpush1.bf16.msra.mxu0 %v803
    %888 = vmatprep.subr.bf16.mxu0 0
    %889 = vmatpush1.bf16.msra.mxu0 %v802
    %890 = vmatprep.subr.bf16.mxu0 0
    %891 = vmatpush2.bf16.msra.mxu0 0
    %892 = vmatprep.subr.bf16.mxu0 0
    %893 = vmatpush2.bf16.msra.mxu0 0
    %894 = vmatprep.subr.bf16.mxu0 0
    %895 = vmatpush2.bf16.msra.mxu0 0
    %896 = vmatprep.subr.bf16.mxu0 0
    %897 = vmatpush2.bf16.msra.mxu0 0
    %898 = vmatprep.subr.bf16.mxu0 0
    %899 = vmatpush2.bf16.msra.mxu0 0
    %900 = vmatprep.subr.bf16.mxu0 0
    %901 = vmatpush2.bf16.msra.mxu0 0
    %902 = vmatprep.subr.bf16.mxu0 0
    %903 = vmatpush2.bf16.msra.mxu0 0
    %904 = vmatprep.subr.bf16.mxu0 0
    %905 = vmatpush2.bf16.msra.mxu0 0
    %906 = vmatprep.mubr.bf16.mxu0 0
    %907 = vmatmul.mubr.bf16.gmra.mxu0 %v858
    %v908 = vpop.f32.mrf.mxu0
    %v909 = vadd.f32 0.0, %v908
    %v910 = vpop.f32.mrf.mxu0
    %v911 = vpop.f32.mrf.mxu0
    %v912 = vadd.f32 0.0, %v911
    %v913 = vpop.f32.mrf.mxu0
    %914 = vmatprep.mubr.bf16.mxu0 0
    %915 = vmatmul.mubr.bf16.gmra.mxu0 %v859
    %v916 = vpop.f32.mrf.mxu0
    %v917 = vadd.f32 0.0, %v916
    %v918 = vpop.f32.mrf.mxu0
    %v919 = vpop.f32.mrf.mxu0
    %v920 = vadd.f32 0.0, %v919
    %v921 = vpop.f32.mrf.mxu0
    %922 = vmatprep.mubr.bf16.mxu0 0
    %923 = vmatmul.mubr.bf16.gmra.mxu0 %v860
    %v924 = vpop.f32.mrf.mxu0
    %v925 = vadd.f32 0.0, %v924
    %v926 = vpop.f32.mrf.mxu0
    %v927 = vpop.f32.mrf.mxu0
    %v928 = vadd.f32 0.0, %v927
    %v929 = vpop.f32.mrf.mxu0
    %930 = vmatprep.mubr.bf16.mxu0 0
    %931 = vmatmul.mubr.bf16.gmra.mxu0 %v861
    %v932 = vpop.f32.mrf.mxu0
    %v933 = vadd.f32 0.0, %v932
    %v934 = vpop.f32.mrf.mxu0
    %v935 = vpop.f32.mrf.mxu0
    %v936 = vadd.f32 0.0, %v935
    %v937 = vpop.f32.mrf.mxu0
    %938 = vmatprep.mubr.bf16.mxu0 0
    %939 = vmatmul.mubr.bf16.gmra.mxu0 %v862
    %v940 = vpop.f32.mrf.mxu0
    %v941 = vadd.f32 0.0, %v940
    %v942 = vpop.f32.mrf.mxu0
    %v943 = vpop.f32.mrf.mxu0
    %v944 = vadd.f32 0.0, %v943
    %v945 = vpop.f32.mrf.mxu0
    %946 = vmatprep.mubr.bf16.mxu0 0
    %947 = vmatmul.mubr.bf16.gmra.mxu0 %v863
    %v948 = vpop.f32.mrf.mxu0
    %v949 = vadd.f32 0.0, %v948
    %v950 = vpop.f32.mrf.mxu0
    %v951 = vpop.f32.mrf.mxu0
    %v952 = vadd.f32 0.0, %v951
    %v953 = vpop.f32.mrf.mxu0
    %954 = vmatprep.mubr.bf16.mxu0 0
    %955 = vmatmul.mubr.bf16.gmra.mxu0 %v864
    %v956 = vpop.f32.mrf.mxu0
    %v957 = vadd.f32 0.0, %v956
    %v958 = vpop.f32.mrf.mxu0
    %v959 = vpop.f32.mrf.mxu0
    %v960 = vadd.f32 0.0, %v959
    %v961 = vpop.f32.mrf.mxu0
    %962 = vmatprep.mubr.bf16.mxu0 0
    %963 = vmatmul.mubr.bf16.gmra.mxu0 %v865
    %v964 = vpop.f32.mrf.mxu0
    %v965 = vadd.f32 0.0, %v964
    %v966 = vpop.f32.mrf.mxu0
    %v967 = vpop.f32.mrf.mxu0
    %v968 = vadd.f32 0.0, %v967
    %v969 = vpop.f32.mrf.mxu0
    %970 = vdwg.mxu0
    %v971 = vmax.f32 %v909, 1.0
    %v972 = vmax.f32 %v912, 1.0
    %v973 = vmax.f32 %v917, 1.0
    %v974 = vmax.f32 %v920, 1.0
    %v975 = vmax.f32 %v925, 1.0
    %v976 = vmax.f32 %v928, 1.0
    %v977 = vmax.f32 %v933, 1.0
    %v978 = vmax.f32 %v936, 1.0
    %v979 = vmax.f32 %v941, 1.0
    %v980 = vmax.f32 %v944, 1.0
    %v981 = vmax.f32 %v949, 1.0
    %v982 = vmax.f32 %v952, 1.0
    %v983 = vmax.f32 %v957, 1.0
    %v984 = vmax.f32 %v960, 1.0
    %v985 = vmax.f32 %v965, 1.0
    %v986 = vmax.f32 %v968, 1.0
    %988 = vset.pattern.permute.xlu0 32
    %989 = vperm.xlu0 %988, %v971
    %v990 = vpop.permute.xlu0 %989
    %993 = vset.pattern.permute.xlu0 32
    %994 = vperm.xlu0 %993, %v972
    %v995 = vpop.permute.xlu0 %994
    %998 = vset.pattern.permute.xlu0 32
    %999 = vperm.xlu0 %998, %v973
    %v1000 = vpop.permute.xlu0 %999
    %1003 = vset.pattern.permute.xlu0 32
    %1004 = vperm.xlu0 %1003, %v974
    %v1005 = vpop.permute.xlu0 %1004
    %1008 = vset.pattern.permute.xlu0 32
    %1009 = vperm.xlu0 %1008, %v975
    %v1010 = vpop.permute.xlu0 %1009
    %1013 = vset.pattern.permute.xlu0 32
    %1014 = vperm.xlu0 %1013, %v976
    %v1015 = vpop.permute.xlu0 %1014
    %1018 = vset.pattern.permute.xlu0 32
    %1019 = vperm.xlu0 %1018, %v977
    %v1020 = vpop.permute.xlu0 %1019
    %1023 = vset.pattern.permute.xlu0 32
    %1024 = vperm.xlu0 %1023, %v978
    %v1025 = vpop.permute.xlu0 %1024
    %1028 = vset.pattern.permute.xlu0 32
    %1029 = vperm.xlu0 %1028, %v979
    %v1030 = vpop.permute.xlu0 %1029
    %1033 = vset.pattern.permute.xlu0 32
    %1034 = vperm.xlu0 %1033, %v980
    %v1035 = vpop.permute.xlu0 %1034
    %1038 = vset.pattern.permute.xlu0 32
    %1039 = vperm.xlu0 %1038, %v981
    %v1040 = vpop.permute.xlu0 %1039
    %1043 = vset.pattern.permute.xlu0 32
    %1044 = vperm.xlu0 %1043, %v982
    %v1045 = vpop.permute.xlu0 %1044
    %1048 = vset.pattern.permute.xlu0 32
    %1049 = vperm.xlu0 %1048, %v983
    %v1050 = vpop.permute.xlu0 %1049
    %1053 = vset.pattern.permute.xlu0 32
    %1054 = vperm.xlu0 %1053, %v984
    %v1055 = vpop.permute.xlu0 %1054
    %1058 = vset.pattern.permute.xlu0 32
    %1059 = vperm.xlu0 %1058, %v985
    %v1060 = vpop.permute.xlu0 %1059
    %1063 = vset.pattern.permute.xlu0 32
    %1064 = vperm.xlu0 %1063, %v986
    %v1065 = vpop.permute.xlu0 %1064
    %v1067 = vrcp.pop %v990
    %v1068 = vmul.f32 %v909, %v1067
    %v1069 = vrcp.pop %v995
    %v1070 = vmul.f32 %v912, %v1069
    %v1071 = vrcp.pop %v1000
    %v1072 = vmul.f32 %v917, %v1071
    %v1073 = vrcp.pop %v1005
    %v1074 = vmul.f32 %v920, %v1073
    %v1075 = vrcp.pop %v1010
    %v1076 = vmul.f32 %v925, %v1075
    %v1077 = vrcp.pop %v1015
    %v1078 = vmul.f32 %v928, %v1077
    %v1079 = vrcp.pop %v1020
    %v1080 = vmul.f32 %v933, %v1079
    %v1081 = vrcp.pop %v1025
    %v1082 = vmul.f32 %v936, %v1081
    %v1083 = vrcp.pop %v1030
    %v1084 = vmul.f32 %v941, %v1083
    %v1085 = vrcp.pop %v1035
    %v1086 = vmul.f32 %v944, %v1085
    %v1087 = vrcp.pop %v1040
    %v1088 = vmul.f32 %v949, %v1087
    %v1089 = vrcp.pop %v1045
    %v1090 = vmul.f32 %v952, %v1089
    %v1091 = vrcp.pop %v1050
    %v1092 = vmul.f32 %v957, %v1091
    %v1093 = vrcp.pop %v1055
    %v1094 = vmul.f32 %v960, %v1093
    %v1095 = vrcp.pop %v1060
    %v1096 = vmul.f32 %v965, %v1095
    %v1097 = vrcp.pop %v1065
    %v1098 = vmul.f32 %v968, %v1097
    %v1099 = vpack.c.bf16 %v1070, %v1068
    %v1100 = vpack.c.bf16 %v1074, %v1072
    %v1101 = vpack.c.bf16 %v1078, %v1076
    %v1102 = vpack.c.bf16 %v1082, %v1080
    %v1103 = vpack.c.bf16 %v1086, %v1084
    %v1104 = vpack.c.bf16 %v1090, %v1088
    %v1105 = vpack.c.bf16 %v1094, %v1092
    %v1106 = vpack.c.bf16 %v1098, %v1096
    %v1107 = vld [vmem:[%s6] sm:$0xf]
    %v1108 = vld [vmem:[%s6 + $0x4] sm:$0xf]
    %v1109 = vld [vmem:[%s6 + $0x8] sm:$0xf]
    %v1110 = vld [vmem:[%s6 + $0xc] sm:$0xf]
    %v1111 = vld [vmem:[%s6 + $0x10] sm:$0xf]
    %v1112 = vld [vmem:[%s6 + $0x14] sm:$0xf]
    %v1113 = vld [vmem:[%s6 + $0x18] sm:$0xf]
    %v1114 = vld [vmem:[%s6 + $0x1c] sm:$0xf]
    %v1115 = vld [vmem:[%s6 + $0x20] sm:$0xf]
    %v1116 = vld [vmem:[%s6 + $0x24] sm:$0xf]
    %v1117 = vld [vmem:[%s6 + $0x28] sm:$0xf]
    %v1118 = vld [vmem:[%s6 + $0x2c] sm:$0xf]
    %v1119 = vld [vmem:[%s6 + $0x30] sm:$0xf]
    %v1120 = vld [vmem:[%s6 + $0x34] sm:$0xf]
    %v1121 = vld [vmem:[%s6 + $0x38] sm:$0xf]
    %v1122 = vld [vmem:[%s6 + $0x3c] sm:$0xf]
    %v1123 = vld [vmem:[%s7] sm:$0xf]
    %v1124 = vld [vmem:[%s7 + $0x4] sm:$0xf]
    %v1125 = vld [vmem:[%s7 + $0x8] sm:$0xf]
    %v1126 = vld [vmem:[%s7 + $0xc] sm:$0xf]
    %v1127 = vld [vmem:[%s7 + $0x10] sm:$0xf]
    %v1128 = vld [vmem:[%s7 + $0x14] sm:$0xf]
    %v1129 = vld [vmem:[%s7 + $0x18] sm:$0xf]
    %v1130 = vld [vmem:[%s7 + $0x1c] sm:$0xf]
    %v1131 = vld [vmem:[%s7 + $0x20] sm:$0xf]
    %v1132 = vld [vmem:[%s7 + $0x24] sm:$0xf]
    %v1133 = vld [vmem:[%s7 + $0x28] sm:$0xf]
    %v1134 = vld [vmem:[%s7 + $0x2c] sm:$0xf]
    %v1135 = vld [vmem:[%s7 + $0x30] sm:$0xf]
    %v1136 = vld [vmem:[%s7 + $0x34] sm:$0xf]
    %v1137 = vld [vmem:[%s7 + $0x38] sm:$0xf]
    %v1138 = vld [vmem:[%s7 + $0x3c] sm:$0xf]
    %v1155 = vunpack.c.l.b16 %v1123
    %v1156 = vunpack.c.l.b16 %v1124
    %v1157 = vunpack.c.l.b16 %v1125
    %v1158 = vunpack.c.l.b16 %v1126
    %v1159 = vunpack.c.l.b16 %v1127
    %v1160 = vunpack.c.l.b16 %v1128
    %v1161 = vunpack.c.l.b16 %v1129
    %v1162 = vunpack.c.l.b16 %v1130
    %v1163 = vunpack.c.l.b16 %v1131
    %v1164 = vunpack.c.l.b16 %v1132
    %v1165 = vunpack.c.l.b16 %v1133
    %v1166 = vunpack.c.l.b16 %v1134
    %v1167 = vunpack.c.l.b16 %v1135
    %v1168 = vunpack.c.l.b16 %v1136
    %v1169 = vunpack.c.l.b16 %v1137
    %v1170 = vunpack.c.l.b16 %v1138
    %v1171 = vpack.c.b16 %v1156, %v1155
    %v1172 = vpack.c.b16 %v1158, %v1157
    %v1173 = vpack.c.b16 %v1160, %v1159
    %v1174 = vpack.c.b16 %v1162, %v1161
    %v1175 = vpack.c.b16 %v1164, %v1163
    %v1176 = vpack.c.b16 %v1166, %v1165
    %v1177 = vpack.c.b16 %v1168, %v1167
    %v1178 = vpack.c.b16 %v1170, %v1169
    %1187 = vmatprep.subr.bf16.mxu0 0
    %1188 = vmatpush1.bf16.msra.mxu0 %v1178
    %1189 = vmatprep.subr.bf16.mxu0 0
    %1190 = vmatpush1.bf16.msra.mxu0 %v1177
    %1191 = vmatprep.subr.bf16.mxu0 0
    %1192 = vmatpush1.bf16.msra.mxu0 %v1176
    %1193 = vmatprep.subr.bf16.mxu0 0
    %1194 = vmatpush1.bf16.msra.mxu0 %v1175
    %1195 = vmatprep.subr.bf16.mxu0 0
    %1196 = vmatpush1.bf16.msra.mxu0 %v1174
    %1197 = vmatprep.subr.bf16.mxu0 0
    %1198 = vmatpush1.bf16.msra.mxu0 %v1173
    %1199 = vmatprep.subr.bf16.mxu0 0
    %1200 = vmatpush1.bf16.msra.mxu0 %v1172
    %1201 = vmatprep.subr.bf16.mxu0 0
    %1202 = vmatpush1.bf16.msra.mxu0 %v1171
    %1203 = vmatprep.subr.bf16.mxu0 0
    %1204 = vmatpush2.bf16.msra.mxu0 0
    %1205 = vmatprep.subr.bf16.mxu0 0
    %1206 = vmatpush2.bf16.msra.mxu0 0
    %1207 = vmatprep.subr.bf16.mxu0 0
    %1208 = vmatpush2.bf16.msra.mxu0 0
    %1209 = vmatprep.subr.bf16.mxu0 0
    %1210 = vmatpush2.bf16.msra.mxu0 0
    %1211 = vmatprep.subr.bf16.mxu0 0
    %1212 = vmatpush2.bf16.msra.mxu0 0
    %1213 = vmatprep.subr.bf16.mxu0 0
    %1214 = vmatpush2.bf16.msra.mxu0 0
    %1215 = vmatprep.subr.bf16.mxu0 0
    %1216 = vmatpush2.bf16.msra.mxu0 0
    %1217 = vmatprep.subr.bf16.mxu0 0
    %1218 = vmatpush2.bf16.msra.mxu0 0
    %1219 = vmatprep.mubr.bf16.mxu0 0
    %1220 = vmatmul.mubr.bf16.gmra.mxu0 %v1099
    %v1221 = vpop.f32.mrf.mxu0
    %v1222 = vadd.f32 0.0, %v1221
    %v1223 = vpop.f32.mrf.mxu0
    %v1224 = vpop.f32.mrf.mxu0
    %v1225 = vadd.f32 0.0, %v1224
    %v1226 = vpop.f32.mrf.mxu0
    %1227 = vmatprep.mubr.bf16.mxu0 0
    %1228 = vmatmul.mubr.bf16.gmra.mxu0 %v1100
    %v1229 = vpop.f32.mrf.mxu0
    %v1230 = vadd.f32 0.0, %v1229
    %v1231 = vpop.f32.mrf.mxu0
    %v1232 = vpop.f32.mrf.mxu0
    %v1233 = vadd.f32 0.0, %v1232
    %v1234 = vpop.f32.mrf.mxu0
    %1235 = vmatprep.mubr.bf16.mxu0 0
    %1236 = vmatmul.mubr.bf16.gmra.mxu0 %v1101
    %v1237 = vpop.f32.mrf.mxu0
    %v1238 = vadd.f32 0.0, %v1237
    %v1239 = vpop.f32.mrf.mxu0
    %v1240 = vpop.f32.mrf.mxu0
    %v1241 = vadd.f32 0.0, %v1240
    %v1242 = vpop.f32.mrf.mxu0
    %1243 = vmatprep.mubr.bf16.mxu0 0
    %1244 = vmatmul.mubr.bf16.gmra.mxu0 %v1102
    %v1245 = vpop.f32.mrf.mxu0
    %v1246 = vadd.f32 0.0, %v1245
    %v1247 = vpop.f32.mrf.mxu0
    %v1248 = vpop.f32.mrf.mxu0
    %v1249 = vadd.f32 0.0, %v1248
    %v1250 = vpop.f32.mrf.mxu0
    %1251 = vmatprep.mubr.bf16.mxu0 0
    %1252 = vmatmul.mubr.bf16.gmra.mxu0 %v1103
    %v1253 = vpop.f32.mrf.mxu0
    %v1254 = vadd.f32 0.0, %v1253
    %v1255 = vpop.f32.mrf.mxu0
    %v1256 = vpop.f32.mrf.mxu0
    %v1257 = vadd.f32 0.0, %v1256
    %v1258 = vpop.f32.mrf.mxu0
    %1259 = vmatprep.mubr.bf16.mxu0 0
    %1260 = vmatmul.mubr.bf16.gmra.mxu0 %v1104
    %v1261 = vpop.f32.mrf.mxu0
    %v1262 = vadd.f32 0.0, %v1261
    %v1263 = vpop.f32.mrf.mxu0
    %v1264 = vpop.f32.mrf.mxu0
    %v1265 = vadd.f32 0.0, %v1264
    %v1266 = vpop.f32.mrf.mxu0
    %1267 = vmatprep.mubr.bf16.mxu0 0
    %1268 = vmatmul.mubr.bf16.gmra.mxu0 %v1105
    %v1269 = vpop.f32.mrf.mxu0
    %v1270 = vadd.f32 0.0, %v1269
    %v1271 = vpop.f32.mrf.mxu0
    %v1272 = vpop.f32.mrf.mxu0
    %v1273 = vadd.f32 0.0, %v1272
    %v1274 = vpop.f32.mrf.mxu0
    %1275 = vmatprep.mubr.bf16.mxu0 0
    %1276 = vmatmul.mubr.bf16.gmra.mxu0 %v1106
    %v1277 = vpop.f32.mrf.mxu0
    %v1278 = vadd.f32 0.0, %v1277
    %v1279 = vpop.f32.mrf.mxu0
    %v1280 = vpop.f32.mrf.mxu0
    %v1281 = vadd.f32 0.0, %v1280
    %v1282 = vpop.f32.mrf.mxu0
    %1283 = vdwg.mxu0
    %v1300 = vunpack.c.l.b16 %v1107
    %v1301 = vunpack.c.l.b16 %v1108
    %v1302 = vunpack.c.l.b16 %v1109
    %v1303 = vunpack.c.l.b16 %v1110
    %v1304 = vunpack.c.l.b16 %v1111
    %v1305 = vunpack.c.l.b16 %v1112
    %v1306 = vunpack.c.l.b16 %v1113
    %v1307 = vunpack.c.l.b16 %v1114
    %v1308 = vunpack.c.l.b16 %v1115
    %v1309 = vunpack.c.l.b16 %v1116
    %v1310 = vunpack.c.l.b16 %v1117
    %v1311 = vunpack.c.l.b16 %v1118
    %v1312 = vunpack.c.l.b16 %v1119
    %v1313 = vunpack.c.l.b16 %v1120
    %v1314 = vunpack.c.l.b16 %v1121
    %v1315 = vunpack.c.l.b16 %v1122
    %v1316 = vpack.c.b16 %v1301, %v1300
    %v1317 = vpack.c.b16 %v1303, %v1302
    %v1318 = vpack.c.b16 %v1305, %v1304
    %v1319 = vpack.c.b16 %v1307, %v1306
    %v1320 = vpack.c.b16 %v1309, %v1308
    %v1321 = vpack.c.b16 %v1311, %v1310
    %v1322 = vpack.c.b16 %v1313, %v1312
    %v1323 = vpack.c.b16 %v1315, %v1314
    %1332 = vmatprep.subr.bf16.mxu0 0
    %1333 = vmatpush1.bf16.msra.mxu0 %v1323
    %1334 = vmatprep.subr.bf16.mxu0 0
    %1335 = vmatpush1.bf16.msra.mxu0 %v1322
    %1336 = vmatprep.subr.bf16.mxu0 0
    %1337 = vmatpush1.bf16.msra.mxu0 %v1321
    %1338 = vmatprep.subr.bf16.mxu0 0
    %1339 = vmatpush1.bf16.msra.mxu0 %v1320
    %1340 = vmatprep.subr.bf16.mxu0 0
    %1341 = vmatpush1.bf16.msra.mxu0 %v1319
    %1342 = vmatprep.subr.bf16.mxu0 0
    %1343 = vmatpush1.bf16.msra.mxu0 %v1318
    %1344 = vmatprep.subr.bf16.mxu0 0
    %1345 = vmatpush1.bf16.msra.mxu0 %v1317
    %1346 = vmatprep.subr.bf16.mxu0 0
    %1347 = vmatpush1.bf16.msra.mxu0 %v1316
    %1348 = vmatprep.subr.bf16.mxu0 0
    %1349 = vmatpush2.bf16.msra.mxu0 0
    %1350 = vmatprep.subr.bf16.mxu0 0
    %1351 = vmatpush2.bf16.msra.mxu0 0
    %1352 = vmatprep.subr.bf16.mxu0 0
    %1353 = vmatpush2.bf16.msra.mxu0 0
    %1354 = vmatprep.subr.bf16.mxu0 0
    %1355 = vmatpush2.bf16.msra.mxu0 0
    %1356 = vmatprep.subr.bf16.mxu0 0
    %1357 = vmatpush2.bf16.msra.mxu0 0
    %1358 = vmatprep.subr.bf16.mxu0 0
    %1359 = vmatpush2.bf16.msra.mxu0 0
    %1360 = vmatprep.subr.bf16.mxu0 0
    %1361 = vmatpush2.bf16.msra.mxu0 0
    %1362 = vmatprep.subr.bf16.mxu0 0
    %1363 = vmatpush2.bf16.msra.mxu0 0
    %1364 = vmatprep.mubr.bf16.mxu0 0
    %1365 = vmatmul.mubr.bf16.gmra.mxu0 %v802
    %v1366 = vpop.f32.mrf.mxu0
    %v1367 = vadd.f32 %v1222, %v1366
    %v1368 = vpop.f32.mrf.mxu0
    %v1369 = vpop.f32.mrf.mxu0
    %v1370 = vadd.f32 %v1225, %v1369
    %v1371 = vpop.f32.mrf.mxu0
    %1372 = vmatprep.mubr.bf16.mxu0 0
    %1373 = vmatmul.mubr.bf16.gmra.mxu0 %v803
    %v1374 = vpop.f32.mrf.mxu0
    %v1375 = vadd.f32 %v1230, %v1374
    %v1376 = vpop.f32.mrf.mxu0
    %v1377 = vpop.f32.mrf.mxu0
    %v1378 = vadd.f32 %v1233, %v1377
    %v1379 = vpop.f32.mrf.mxu0
    %1380 = vmatprep.mubr.bf16.mxu0 0
    %1381 = vmatmul.mubr.bf16.gmra.mxu0 %v804
    %v1382 = vpop.f32.mrf.mxu0
    %v1383 = vadd.f32 %v1238, %v1382
    %v1384 = vpop.f32.mrf.mxu0
    %v1385 = vpop.f32.mrf.mxu0
    %v1386 = vadd.f32 %v1241, %v1385
    %v1387 = vpop.f32.mrf.mxu0
    %1388 = vmatprep.mubr.bf16.mxu0 0
    %1389 = vmatmul.mubr.bf16.gmra.mxu0 %v805
    %v1390 = vpop.f32.mrf.mxu0
    %v1391 = vadd.f32 %v1246, %v1390
    %v1392 = vpop.f32.mrf.mxu0
    %v1393 = vpop.f32.mrf.mxu0
    %v1394 = vadd.f32 %v1249, %v1393
    %v1395 = vpop.f32.mrf.mxu0
    %1396 = vmatprep.mubr.bf16.mxu0 0
    %1397 = vmatmul.mubr.bf16.gmra.mxu0 %v806
    %v1398 = vpop.f32.mrf.mxu0
    %v1399 = vadd.f32 %v1254, %v1398
    %v1400 = vpop.f32.mrf.mxu0
    %v1401 = vpop.f32.mrf.mxu0
    %v1402 = vadd.f32 %v1257, %v1401
    %v1403 = vpop.f32.mrf.mxu0
    %1404 = vmatprep.mubr.bf16.mxu0 0
    %1405 = vmatmul.mubr.bf16.gmra.mxu0 %v807
    %v1406 = vpop.f32.mrf.mxu0
    %v1407 = vadd.f32 %v1262, %v1406
    %v1408 = vpop.f32.mrf.mxu0
    %v1409 = vpop.f32.mrf.mxu0
    %v1410 = vadd.f32 %v1265, %v1409
    %v1411 = vpop.f32.mrf.mxu0
    %1412 = vmatprep.mubr.bf16.mxu0 0
    %1413 = vmatmul.mubr.bf16.gmra.mxu0 %v808
    %v1414 = vpop.f32.mrf.mxu0
    %v1415 = vadd.f32 %v1270, %v1414
    %v1416 = vpop.f32.mrf.mxu0
    %v1417 = vpop.f32.mrf.mxu0
    %v1418 = vadd.f32 %v1273, %v1417
    %v1419 = vpop.f32.mrf.mxu0
    %1420 = vmatprep.mubr.bf16.mxu0 0
    %1421 = vmatmul.mubr.bf16.gmra.mxu0 %v809
    %v1422 = vpop.f32.mrf.mxu0
    %v1423 = vadd.f32 %v1278, %v1422
    %v1424 = vpop.f32.mrf.mxu0
    %v1425 = vpop.f32.mrf.mxu0
    %v1426 = vadd.f32 %v1281, %v1425
    %v1427 = vpop.f32.mrf.mxu0
    %1428 = vdwg.mxu0
    %v1429 = vld [vmem:[%s8] sm:$0x1]
    %v1431 = vlaneseq
    %v1432 = vshrl.u32 %v1431, 7
    %v1433 = vsub.s32 0, %v1432
    %v1434 = vrot.slane %v1429, %v1433
    %v1436 = vadd.f32 %v1367, %v1434
    %v1437 = vadd.f32 %v1370, %v1434
    %v1438 = vadd.f32 %v1375, %v1434
    %v1439 = vadd.f32 %v1378, %v1434
    %v1440 = vadd.f32 %v1383, %v1434
    %v1441 = vadd.f32 %v1386, %v1434
    %v1442 = vadd.f32 %v1391, %v1434
    %v1443 = vadd.f32 %v1394, %v1434
    %v1444 = vadd.f32 %v1399, %v1434
    %v1445 = vadd.f32 %v1402, %v1434
    %v1446 = vadd.f32 %v1407, %v1434
    %v1447 = vadd.f32 %v1410, %v1434
    %v1448 = vadd.f32 %v1415, %v1434
    %v1449 = vadd.f32 %v1418, %v1434
    %v1450 = vadd.f32 %v1423, %v1434
    %v1451 = vadd.f32 %v1426, %v1434
    %v1452 = vmax.f32 %v1436, 0.0
    %v1453 = vmax.f32 %v1437, 0.0
    %v1454 = vmax.f32 %v1438, 0.0
    %v1455 = vmax.f32 %v1439, 0.0
    %v1456 = vmax.f32 %v1440, 0.0
    %v1457 = vmax.f32 %v1441, 0.0
    %v1458 = vmax.f32 %v1442, 0.0
    %v1459 = vmax.f32 %v1443, 0.0
    %v1460 = vmax.f32 %v1444, 0.0
    %v1461 = vmax.f32 %v1445, 0.0
    %v1462 = vmax.f32 %v1446, 0.0
    %v1463 = vmax.f32 %v1447, 0.0
    %v1464 = vmax.f32 %v1448, 0.0
    %v1465 = vmax.f32 %v1449, 0.0
    %v1466 = vmax.f32 %v1450, 0.0
    %v1467 = vmax.f32 %v1451, 0.0
    %1468 = vst [vmem:[%s9] sm:$0xff] %v1452
    %1469 = vst [vmem:[%s9 + $0x8] sm:$0xff] %v1453
    %1470 = vst [vmem:[%s9 + $0x10] sm:$0xff] %v1454
    %1471 = vst [vmem:[%s9 + $0x18] sm:$0xff] %v1455
    %1472 = vst [vmem:[%s9 + $0x20] sm:$0xff] %v1456
    %1473 = vst [vmem:[%s9 + $0x28] sm:$0xff] %v1457
    %1474 = vst [vmem:[%s9 + $0x30] sm:$0xff] %v1458
    %1475 = vst [vmem:[%s9 + $0x38] sm:$0xff] %v1459
    %1476 = vst [vmem:[%s9 + $0x40] sm:$0xff] %v1460
    %1477 = vst [vmem:[%s9 + $0x48] sm:$0xff] %v1461
    %1478 = vst [vmem:[%s9 + $0x50] sm:$0xff] %v1462
    %1479 = vst [vmem:[%s9 + $0x58] sm:$0xff] %v1463
    %1480 = vst [vmem:[%s9 + $0x60] sm:$0xff] %v1464
    %1481 = vst [vmem:[%s9 + $0x68] sm:$0xff] %v1465
    %1482 = vst [vmem:[%s9 + $0x70] sm:$0xff] %v1466
    %1483 = vst [vmem:[%s9 + $0x78] sm:$0xff] %v1467
    // Predicated region
    $region46: #{_lambda_.1} parent=1 // pred_check
      _
    $region47: #{_lambda_.1} parent=1 // pred_check_branch
      %1485 = sbr.rel (0) target = $region49
    $region48: #{_lambda_.1} parent=1 // pred_region
      _
    $region49: #{_lambda_.1} parent=1 // pred_fallthru
      _
    // Predicated region
    $region50: #{_lambda_.1} parent=1 // pred_check
      _
    $region51: #{_lambda_.1} parent=1 // pred_check_branch
      %1487 = sbr.rel (0) target = $region53
    $region52: #{_lambda_.1} parent=1 // pred_region
      _
    $region53: #{_lambda_.1} parent=1 // pred_fallthru
      _
    %1488 = vsyncpa [#allocation3], 1
    %1489 = vsyncpa [#allocation5], 1

</llo_original>
